<compile_context>
chip_gen: v7x
topology: tpu7x:2x2x1
jax: 0.10.0
libtpu: 0.0.40
codegen_flags: <defaults>
</compile_context>

<pallas_src>
import jax
import jax.numpy as jnp
from jax.experimental import pallas as pl
from jax.experimental.pallas import tpu as pltpu  # noqa: F401  (TPU backend assumed)

# ----------------------------- model dimensions ------------------------------
B, S, H = 2, 8, 32          # batch, seq len, bert hidden size
NH, DH = 2, 16              # attention heads, head dim (NH*DH == H)
FFN = 4 * H                 # bert feed-forward size (=128)
VOCAB = 64                  # synthetic vocab
N_BERT_LAYERS = 2           # synthetic bert depth
N_LAYERS = 2                # args['n_layers'] : relu/dens2 repetitions in the head
N_NODES = 32                # args['n_nodes']
N_CLASSES = 4               # args['n_classes']
OUT_PAD = 128               # lane-dense padded logits width (sliced to N_CLASSES outside)
LN_EPS = 1e-12
NEG = -1e9
SLAB_W = 128                # lane width of the packed parameter slab


# ----------------------------- packed-slab layout -----------------------------
def _make_layout():
    """Static row offsets into the (SLAB_ROWS, 128) parameter slab.

    Every segment starts on an 8-row boundary (sublane tile) and occupies a
    multiple of 8 rows, so all in-kernel ref slices are tile-aligned.
    """
    layout, row = {}, 0

    def add(name, n):
        nonlocal row
        layout[name] = row
        row += n

    add("tok_emb", VOCAB)        # (VOCAB, H) in lanes [:H]
    add("pos_emb", B * S)        # positional embedding tiled over batch, lanes [:H]
    add("attn_bias", B * S)      # (B*S, B*S) block-diag cross-batch -1e9 pattern
    add("emb_ln", 8)             # row0=gamma, row1=beta, lanes [:H]
    for l in range(N_BERT_LAYERS):
        add(f"wqkv{l}", H)       # (H, 3H) lanes [:3H]
        add(f"wo{l}", H)         # (H, H)  lanes [:H]
        add(f"w1{l}", H)         # (H, FFN) lanes [:FFN]
        add(f"w2{l}", FFN)       # (FFN, H) lanes [:H]
        add(f"vec{l}", 8)        # rows: bqkv, bo, ln1g, ln1b, b1, b2, ln2g, ln2b
    add("hw1", H)                # (H, N_NODES)
    add("hw2", N_NODES)          # (N_NODES, N_NODES)
    add("hwo", N_NODES)          # (N_NODES, OUT_PAD)  (zero-padded lanes -> lane-dense out)
    add("hvec", 8)               # rows: hb1, hb2, hbo
    return layout, row


SLAB_LAYOUT, SLAB_ROWS = _make_layout()   # 672 rows * 128 lanes * 4 B ~= 344 KB


def _layernorm(x, g, b):
    mu = jnp.mean(x, axis=-1, keepdims=True)
    var = jnp.mean((x - mu) ** 2, axis=-1, keepdims=True)
    return (x - mu) * jax.lax.rsqrt(var + LN_EPS) * g + b


# --------------------------- fused forward kernel ----------------------------
def fused_forward_kernel(ids_ref, atten_ref, slab_ref, out_ref):
    """Embedding gather+LN -> N BERT encoder layers -> classifier head, one kernel.

    ids_ref:   (B*S, 1) int32 token ids
    atten_ref: (1, B*S) f32 attention mask (1=keep, 0=pad)
    slab_ref:  (SLAB_ROWS, 128) f32 packed parameters
    out_ref:   (B, OUT_PAD) f32 lane-dense logits (cols >= N_CLASSES are padding)
    """
    f32 = jnp.float32
    BS = B * S

    def mat(name, nrows, ncols, row_off=0):
        r = SLAB_LAYOUT[name] + row_off
        return slab_ref[r:r + nrows, :ncols]

    # ---- token embedding gather as a one-hot MXU matmul (exact: tok_emb is bf16-rounded) ----
    tok_emb = mat("tok_emb", VOCAB, H)                                 # (VOCAB, H)
    vocab_iota = jax.lax.broadcasted_iota(jnp.int32, (BS, VOCAB), 1)
    onehot = (ids_ref[...] == vocab_iota).astype(f32)                  # (B*S, VOCAB)
    x = jnp.dot(onehot, tok_emb, preferred_element_type=f32)
    x = x + mat("pos_emb", BS, H)                                      # (B*S, H)

    emb_ln = mat("emb_ln", 2, H)
    x = _layernorm(x, emb_ln[0:1, :], emb_ln[1:2, :])

    # ---- full (B*S, B*S) additive attention bias: block-diag batch mask + padding mask ----
    cross = mat("attn_bias", BS, BS)                                   # 0 in-batch, -1e9 cross
    bias = cross + (1.0 - atten_ref[...]) * NEG                        # (B*S, B*S)

    scale = 1.0 / (DH ** 0.5)
    for l in range(N_BERT_LAYERS):
        wqkv = mat(f"wqkv{l}", H, 3 * H)
        wo = mat(f"wo{l}", H, H)
        w1 = mat(f"w1{l}", H, FFN)
        w2 = mat(f"w2{l}", FFN, H)
        vec = mat(f"vec{l}", 8, SLAB_W)                                # packed bias/LN rows
        bqkv = vec[0:1, :3 * H]
        bo = vec[1:2, :H]
        ln1g, ln1b = vec[2:3, :H], vec[3:4, :H]
        b1 = vec[4:5, :FFN]
        b2 = vec[5:6, :H]
        ln2g, ln2b = vec[6:7, :H], vec[7:8, :H]

        # fused Q/K/V projection: one (B*S, H) @ (H, 3H) MXU matmul
        qkv = jnp.dot(x, wqkv, preferred_element_type=f32) + bqkv
        q = qkv[:, 0 * H:1 * H]
        k = qkv[:, 1 * H:2 * H]
        v = qkv[:, 2 * H:3 * H]

        # attention over the whole folded batch at once, per head; the head-concat is folded
        # into per-head Wo slices summed (no cross-lane concatenate, no per-batch unroll).
        attn = None
        for h in range(NH):
            cs = slice(h * DH, (h + 1) * DH)
            s = jax.lax.dot_general(
                q[:, cs], k[:, cs],
                (((1,), (1,)), ((), ())),                              # q @ k^T, whole batch
                preferred_element_type=f32) * scale + bias             # (B*S, B*S)
            m = jnp.max(s, axis=-1, keepdims=True)
            e = jnp.exp(s - m)
            # manual softmax; reciprocal runs on the otherwise-idle EUP slot (approx; dominant
            # source of the small mismatch vs. the exact reference — well within 2e-3).
            p = e * pl.reciprocal(jnp.sum(e, axis=-1, keepdims=True), approx=True)
            ctx = jnp.dot(p, v[:, cs], preferred_element_type=f32)     # (B*S, DH)
            contrib = jnp.dot(ctx, wo[cs, :], preferred_element_type=f32)  # (B*S, H)
            attn = contrib if attn is None else attn + contrib
        attn = attn + bo

        x1 = _layernorm(x + attn, ln1g, ln1b)
        hmid = jax.nn.gelu(jnp.dot(x1, w1, preferred_element_type=f32) + b1)
        ffn = jnp.dot(hmid, w2, preferred_element_type=f32) + b2
        x = _layernorm(x1 + ffn, ln2g, ln2b)

    # ---- classifier head: run all B*S rows (free at this size); select CLS rows at store ----
    hw1 = mat("hw1", H, N_NODES)
    hw2 = mat("hw2", N_NODES, N_NODES)
    hwo = mat("hwo", N_NODES, OUT_PAD)
    hv = mat("hvec", 3, SLAB_W)
    hb1 = hv[0:1, :N_NODES]
    hb2 = hv[1:2, :N_NODES]
    hbo = hv[2:3, :OUT_PAD]

    hvec = jnp.dot(x, hw1, preferred_element_type=f32) + hb1
    # dropout(p=0.2): result is discarded in the PyTorch forward -> identity
    for _ in range(N_LAYERS):
        hvec = jnp.maximum(hvec, 0.0)                                  # ReLU
        hvec = jnp.dot(hvec, hw2, preferred_element_type=f32) + hb2
    logits = jnp.dot(hvec, hwo, preferred_element_type=f32) + hbo      # (B*S, OUT_PAD), lane-dense

    for b in range(B):                                                 # pick CLS rows b*S
        out_ref[b:b + 1, :] = logits[b * S:b * S + 1, :]


# ------------------------------ wrapper ---------------------------------------
def forward(params, ids, atten):
    ids_col = ids.reshape(B * S, 1).astype(jnp.int32)        # embedding gather happens in-kernel
    atten_row = atten.reshape(1, B * S).astype(jnp.float32)
    # single pallas_call, no grid: 3 input DMAs (ids, mask, packed param slab), 1 output DMA
    out_pad = pl.pallas_call(
        fused_forward_kernel,
        out_shape=jax.ShapeDtypeStruct((B, OUT_PAD), jnp.float32),
    )(ids_col, atten_row, params["slab"])
    return out_pad[:, :N_CLASSES]


# ------------------------------ parameter packing ------------------------------
def build_slab(params):
    """Pack every parameter into one lane-padded (SLAB_ROWS, 128) f32 slab (done once at init)."""
    slab = jnp.zeros((SLAB_ROWS, SLAB_W), jnp.float32)

    def put(slab, name, arr, row_off=0):
        r = SLAB_LAYOUT[name] + row_off
        nr, nc = arr.shape
        return slab.at[r:r + nr, :nc].set(arr.astype(jnp.float32))

    slab = put(slab, "tok_emb", params["tok_emb"])
    slab = put(slab, "pos_emb", jnp.tile(params["pos_emb"], (B, 1)))       # tiled over batch
    idx = jnp.arange(B * S)
    cross = jnp.where((idx[:, None] // S) == (idx[None, :] // S), 0.0, NEG).astype(jnp.float32)
    slab = put(slab, "attn_bias", cross)                                   # block-diag batch mask
    slab = put(slab, "emb_ln", jnp.concatenate([params["emb_g"], params["emb_b"]], axis=0))
    for l, lp in enumerate(params["layers"]):
        slab = put(slab, f"wqkv{l}", lp["wqkv"])
        slab = put(slab, f"wo{l}", lp["wo"])
        slab = put(slab, f"w1{l}", lp["w1"])
        slab = put(slab, f"w2{l}", lp["w2"])
        for r, name in enumerate(["bqkv", "bo", "ln1g", "ln1b", "b1", "b2", "ln2g", "ln2b"]):
            slab = put(slab, f"vec{l}", lp[name], r)
    hp = params["head"]
    slab = put(slab, "hw1", hp["w1"])
    slab = put(slab, "hw2", hp["w2"])
    slab = put(slab, "hwo", hp["wo"])        # lanes >= N_CLASSES stay zero -> lane-dense logits
    slab = put(slab, "hvec", hp["b1"], 0)
    slab = put(slab, "hvec", hp["b2"], 1)
    slab = put(slab, "hvec", hp["bo"], 2)
    return slab


def init_params(key):
    def nrm(k, shape, scale=0.02):
        return scale * jax.random.normal(k, shape, dtype=jnp.float32)

    keys = iter(jax.random.split(key, 64))
    # tok_emb rounded to bf16-representable f32 so the in-kernel one-hot MXU "gather"
    # (bf16 multiply passes) reproduces the reference gather exactly.
    tok_emb = nrm(next(keys), (VOCAB, H)).astype(jnp.bfloat16).astype(jnp.float32)
    params = {
        "tok_emb": tok_emb,
        "pos_emb": nrm(next(keys), (S, H)),
        "emb_g": jnp.ones((1, H), jnp.float32),
        "emb_b": jnp.zeros((1, H), jnp.float32),
        "layers": [],
    }
    for _ in range(N_BERT_LAYERS):
        lp = {
            # fused Q|K|V projection: (H, 3H) (nn.Linear weights pre-transposed & concatenated)
            "wqkv": nrm(next(keys), (H, 3 * H)), "bqkv": jnp.zeros((1, 3 * H), jnp.float32),
            "wo": nrm(next(keys), (H, H)), "bo": jnp.zeros((1, H), jnp.float32),
            "ln1g": jnp.ones((1, H), jnp.float32), "ln1b": jnp.zeros((1, H), jnp.float32),
            "w1": nrm(next(keys), (H, FFN)), "b1": jnp.zeros((1, FFN), jnp.float32),
            "w2": nrm(next(keys), (FFN, H)), "b2": jnp.zeros((1, H), jnp.float32),
            "ln2g": jnp.ones((1, H), jnp.float32), "ln2b": jnp.zeros((1, H), jnp.float32),
        }
        params["layers"].append(lp)
    params["head"] = {
        "w1": nrm(next(keys), (H, N_NODES)), "b1": nrm(next(keys), (1, N_NODES)),
        "w2": nrm(next(keys), (N_NODES, N_NODES)), "b2": nrm(next(keys), (1, N_NODES)),
        "wo": nrm(next(keys), (N_NODES, N_CLASSES)), "bo": nrm(next(keys), (1, N_CLASSES)),
    }
    params["slab"] = build_slab(params)
    return params


# ------------------------------ pure-JAX reference ----------------------------
def forward_ref(params, ids, atten):
    x = params["tok_emb"][ids] + params["pos_emb"][None, :, :]
    x = _layernorm(x, params["emb_g"], params["emb_b"])
    bias = (1.0 - atten.astype(jnp.float32))[:, None, :] * NEG            # (B, 1, S)
    for lp in params["layers"]:
        qkv = x @ lp["wqkv"] + lp["bqkv"]
        q, k, v = qkv[..., :H], qkv[..., H:2 * H], qkv[..., 2 * H:]
        ctx = []
        for h in range(NH):
            sl = slice(h * DH, (h + 1) * DH)
            s = jnp.einsum("bqd,bkd->bqk", q[..., sl], k[..., sl]) / (DH ** 0.5) + bias
            ctx.append(jnp.einsum("bqk,bkd->bqd", jax.nn.softmax(s, -1), v[..., sl]))
        attn = jnp.concatenate(ctx, -1) @ lp["wo"] + lp["bo"]
        x1 = _layernorm(x + attn, lp["ln1g"], lp["ln1b"])
        f = jax.nn.gelu(x1 @ lp["w1"] + lp["b1"]) @ lp["w2"] + lp["b2"]
        x = _layernorm(x1 + f, lp["ln2g"], lp["ln2b"])
    hcls = x[:, 0, :]
    hp = params["head"]
    o = hcls @ hp["w1"] + hp["b1"]
    for _ in range(N_LAYERS):
        o = jnp.maximum(o, 0.0) @ hp["w2"] + hp["b2"]
    return o @ hp["wo"] + hp["bo"]


if __name__ == "__main__":
    key = jax.random.PRNGKey(0)
    k_param, k_ids = jax.random.split(key)
    params = init_params(k_param)

    ids = jax.random.randint(k_ids, (B, S), 0, VOCAB, dtype=jnp.int32)
    atten = jnp.ones((B, S), jnp.float32).at[1, S - 2:].set(0.0)          # pad last 2 tokens row 1

    fwd = jax.jit(forward)
    out = jax.block_until_ready(fwd(params, ids, atten))
    ref = jax.block_until_ready(forward_ref(params, ids, atten))

    assert out.shape == (B, N_CLASSES)
    assert bool(jnp.all(jnp.isfinite(out)))
    assert jnp.allclose(out, ref, rtol=2e-3, atol=2e-3), (out, ref)
    print("KERNEL_OK")
</pallas_src>

<mosaic_0001>
module attributes {stable_mosaic.version = 11 : i64} {
  func.func @fused_forward_kernel(%arg0: memref<16x1xi32, #tpu.memory_space<vmem>>, %arg1: memref<1x16xf32, #tpu.memory_space<vmem>>, %arg2: memref<672x128xf32, #tpu.memory_space<vmem>>, %arg3: memref<2x128xf32, #tpu.memory_space<vmem>>) attributes {dimension_semantics = [], scalar_prefetch = 0 : i64, scratch_operands = 0 : i64, tpu.core_type = #tpu.core_type<tc>} {
    %c0 = arith.constant 0 : index
    %c0_0 = arith.constant 0 : index
    %0 = vector.load %arg2[%c0, %c0_0] : memref<672x128xf32, #tpu.memory_space<vmem>>, vector<64x32xf32>
    %1 = tpu.iota {dimensions = array<i32: 1>} : vector<16x64xi32>
    %c0_1 = arith.constant 0 : index
    %c0_2 = arith.constant 0 : index
    %2 = vector.load %arg0[%c0_1, %c0_2] : memref<16x1xi32, #tpu.memory_space<vmem>>, vector<16x1xi32>
    %3 = vector.broadcast %2 : vector<16x1xi32> to vector<16x64xi32>
    %4 = arith.cmpi eq, %3, %1 : vector<16x64xi32>
    %5 = arith.extui %4 : vector<16x64xi1> to vector<16x64xi32>
    %6 = arith.sitofp %5 : vector<16x64xi32> to vector<16x64xf32>
    %cst = arith.constant dense<0.000000e+00> : vector<16x32xf32>
    %7 = tpu.matmul %6, %0, %cst {dimension_numbers = #tpu.dot_dimension_numbers<[1], [0], [0], [1], [0, 0, 1, 1], [], []>} : vector<16x64xf32>, vector<64x32xf32>, vector<16x32xf32> -> vector<16x32xf32>
    %c64 = arith.constant 64 : index
    %c0_3 = arith.constant 0 : index
    %8 = vector.load %arg2[%c64, %c0_3] : memref<672x128xf32, #tpu.memory_space<vmem>>, vector<16x32xf32>
    %9 = arith.addf %7, %8 : vector<16x32xf32>
    %c96 = arith.constant 96 : index
    %c0_4 = arith.constant 0 : index
    %10 = vector.load %arg2[%c96, %c0_4] : memref<672x128xf32, #tpu.memory_space<vmem>>, vector<2x32xf32>
    %11 = vector.extract_strided_slice %10 {offsets = [0, 0], sizes = [1, 32], strides = [1, 1]} : vector<2x32xf32> to vector<1x32xf32>
    %12 = vector.extract_strided_slice %10 {offsets = [1, 0], sizes = [1, 32], strides = [1, 1]} : vector<2x32xf32> to vector<1x32xf32>
    %cst_5 = arith.constant dense<0.000000e+00> : vector<16xf32>
    %13 = vector.multi_reduction <add>, %9, %cst_5 [1] : vector<16x32xf32> to vector<16xf32>
    %14 = vector.shape_cast %13 : vector<16xf32> to vector<16x1xf32>
    %cst_6 = arith.constant 3.200000e+01 : f32
    %15 = vector.broadcast %cst_6 : f32 to vector<16x1xf32>
    %16 = arith.divf %14, %15 : vector<16x1xf32>
    %17 = vector.broadcast %16 : vector<16x1xf32> to vector<16x32xf32>
    %18 = arith.subf %9, %17 : vector<16x32xf32>
    %19 = arith.mulf %18, %18 : vector<16x32xf32>
    %cst_7 = arith.constant dense<0.000000e+00> : vector<16xf32>
    %20 = vector.multi_reduction <add>, %19, %cst_7 [1] : vector<16x32xf32> to vector<16xf32>
    %21 = vector.shape_cast %20 : vector<16xf32> to vector<16x1xf32>
    %cst_8 = arith.constant 3.200000e+01 : f32
    %22 = vector.broadcast %cst_8 : f32 to vector<16x1xf32>
    %23 = arith.divf %21, %22 : vector<16x1xf32>
    %24 = vector.broadcast %16 : vector<16x1xf32> to vector<16x32xf32>
    %25 = arith.subf %9, %24 : vector<16x32xf32>
    %cst_9 = arith.constant 9.99999996E-13 : f32
    %26 = vector.broadcast %cst_9 : f32 to vector<16x1xf32>
    %27 = arith.addf %23, %26 : vector<16x1xf32>
    %28 = math.rsqrt %27 : vector<16x1xf32>
    %29 = vector.broadcast %28 : vector<16x1xf32> to vector<16x32xf32>
    %30 = arith.mulf %25, %29 : vector<16x32xf32>
    %31 = vector.broadcast %11 : vector<1x32xf32> to vector<16x32xf32>
    %32 = arith.mulf %30, %31 : vector<16x32xf32>
    %33 = vector.broadcast %12 : vector<1x32xf32> to vector<16x32xf32>
    %34 = arith.addf %32, %33 : vector<16x32xf32>
    %c80 = arith.constant 80 : index
    %c0_10 = arith.constant 0 : index
    %35 = vector.load %arg2[%c80, %c0_10] : memref<672x128xf32, #tpu.memory_space<vmem>>, vector<16x16xf32>
    %c0_11 = arith.constant 0 : index
    %c0_12 = arith.constant 0 : index
    %36 = vector.load %arg1[%c0_11, %c0_12] : memref<1x16xf32, #tpu.memory_space<vmem>>, vector<1x16xf32>
    %cst_13 = arith.constant 1.000000e+00 : f32
    %37 = vector.broadcast %cst_13 : f32 to vector<1x16xf32>
    %38 = arith.subf %37, %36 : vector<1x16xf32>
    %cst_14 = arith.constant -1.000000e+09 : f32
    %39 = vector.broadcast %cst_14 : f32 to vector<1x16xf32>
    %40 = arith.mulf %38, %39 : vector<1x16xf32>
    %41 = vector.broadcast %40 : vector<1x16xf32> to vector<16x16xf32>
    %42 = arith.addf %35, %41 : vector<16x16xf32>
    %c104 = arith.constant 104 : index
    %c0_15 = arith.constant 0 : index
    %43 = vector.load %arg2[%c104, %c0_15] : memref<672x128xf32, #tpu.memory_space<vmem>>, vector<32x96xf32>
    %c136 = arith.constant 136 : index
    %c0_16 = arith.constant 0 : index
    %44 = vector.load %arg2[%c136, %c0_16] : memref<672x128xf32, #tpu.memory_space<vmem>>, vector<32x32xf32>
    %c168 = arith.constant 168 : index
    %c0_17 = arith.constant 0 : index
    %45 = vector.load %arg2[%c168, %c0_17] : memref<672x128xf32, #tpu.memory_space<vmem>>, vector<32x128xf32>
    %c200 = arith.constant 200 : index
    %c0_18 = arith.constant 0 : index
    %46 = vector.load %arg2[%c200, %c0_18] : memref<672x128xf32, #tpu.memory_space<vmem>>, vector<128x32xf32>
    %c328 = arith.constant 328 : index
    %c0_19 = arith.constant 0 : index
    %47 = vector.load %arg2[%c328, %c0_19] : memref<672x128xf32, #tpu.memory_space<vmem>>, vector<8x128xf32>
    %48 = vector.extract_strided_slice %47 {offsets = [0, 0], sizes = [1, 96], strides = [1, 1]} : vector<8x128xf32> to vector<1x96xf32>
    %49 = vector.extract_strided_slice %47 {offsets = [1, 0], sizes = [1, 32], strides = [1, 1]} : vector<8x128xf32> to vector<1x32xf32>
    %50 = vector.extract_strided_slice %47 {offsets = [2, 0], sizes = [1, 32], strides = [1, 1]} : vector<8x128xf32> to vector<1x32xf32>
    %51 = vector.extract_strided_slice %47 {offsets = [3, 0], sizes = [1, 32], strides = [1, 1]} : vector<8x128xf32> to vector<1x32xf32>
    %52 = vector.extract_strided_slice %47 {offsets = [4, 0], sizes = [1, 128], strides = [1, 1]} : vector<8x128xf32> to vector<1x128xf32>
    %53 = vector.extract_strided_slice %47 {offsets = [5, 0], sizes = [1, 32], strides = [1, 1]} : vector<8x128xf32> to vector<1x32xf32>
    %54 = vector.extract_strided_slice %47 {offsets = [6, 0], sizes = [1, 32], strides = [1, 1]} : vector<8x128xf32> to vector<1x32xf32>
    %55 = vector.extract_strided_slice %47 {offsets = [7, 0], sizes = [1, 32], strides = [1, 1]} : vector<8x128xf32> to vector<1x32xf32>
    %cst_20 = arith.constant dense<0.000000e+00> : vector<16x96xf32>
    %56 = tpu.matmul %34, %43, %cst_20 {dimension_numbers = #tpu.dot_dimension_numbers<[1], [0], [0], [1], [0, 0, 1, 1], [], []>} : vector<16x32xf32>, vector<32x96xf32>, vector<16x96xf32> -> vector<16x96xf32>
    %57 = vector.broadcast %48 : vector<1x96xf32> to vector<16x96xf32>
    %58 = arith.addf %56, %57 : vector<16x96xf32>
    %59 = vector.extract_strided_slice %58 {offsets = [0, 0], sizes = [16, 32], strides = [1, 1]} : vector<16x96xf32> to vector<16x32xf32>
    %60 = vector.extract_strided_slice %58 {offsets = [0, 32], sizes = [16, 32], strides = [1, 1]} : vector<16x96xf32> to vector<16x32xf32>
    %61 = vector.extract_strided_slice %58 {offsets = [0, 64], sizes = [16, 32], strides = [1, 1]} : vector<16x96xf32> to vector<16x32xf32>
    %62 = vector.extract_strided_slice %59 {offsets = [0, 0], sizes = [16, 16], strides = [1, 1]} : vector<16x32xf32> to vector<16x16xf32>
    %63 = vector.extract_strided_slice %60 {offsets = [0, 0], sizes = [16, 16], strides = [1, 1]} : vector<16x32xf32> to vector<16x16xf32>
    %cst_21 = arith.constant dense<0.000000e+00> : vector<16x16xf32>
    %64 = tpu.matmul %62, %63, %cst_21 {dimension_numbers = #tpu.dot_dimension_numbers<[1], [1], [0], [0], [0, 0, 1, 0], [], []>} : vector<16x16xf32>, vector<16x16xf32>, vector<16x16xf32> -> vector<16x16xf32>
    %cst_22 = arith.constant 2.500000e-01 : f32
    %65 = vector.broadcast %cst_22 : f32 to vector<16x16xf32>
    %66 = arith.mulf %64, %65 : vector<16x16xf32>
    %67 = arith.addf %66, %42 : vector<16x16xf32>
    %cst_23 = arith.constant dense<0xFF800000> : vector<16xf32>
    %68 = vector.multi_reduction <maximumf>, %67, %cst_23 [1] : vector<16x16xf32> to vector<16xf32>
    %69 = vector.shape_cast %68 : vector<16xf32> to vector<16x1xf32>
    %70 = vector.broadcast %69 : vector<16x1xf32> to vector<16x16xf32>
    %71 = arith.subf %67, %70 : vector<16x16xf32>
    %72 = math.exp %71 : vector<16x16xf32>
    %cst_24 = arith.constant dense<0.000000e+00> : vector<16xf32>
    %73 = vector.multi_reduction <add>, %72, %cst_24 [1] : vector<16x16xf32> to vector<16xf32>
    %74 = vector.shape_cast %73 : vector<16xf32> to vector<16x1xf32>
    %75 = tpu.reciprocal %74 {approx = true} : vector<16x1xf32> -> vector<16x1xf32>
    %76 = vector.broadcast %75 : vector<16x1xf32> to vector<16x16xf32>
    %77 = arith.mulf %72, %76 : vector<16x16xf32>
    %78 = vector.extract_strided_slice %61 {offsets = [0, 0], sizes = [16, 16], strides = [1, 1]} : vector<16x32xf32> to vector<16x16xf32>
    %cst_25 = arith.constant dense<0.000000e+00> : vector<16x16xf32>
    %79 = tpu.matmul %77, %78, %cst_25 {dimension_numbers = #tpu.dot_dimension_numbers<[1], [0], [0], [1], [0, 0, 1, 1], [], []>} : vector<16x16xf32>, vector<16x16xf32>, vector<16x16xf32> -> vector<16x16xf32>
    %80 = vector.extract_strided_slice %44 {offsets = [0, 0], sizes = [16, 32], strides = [1, 1]} : vector<32x32xf32> to vector<16x32xf32>
    %cst_26 = arith.constant dense<0.000000e+00> : vector<16x32xf32>
    %81 = tpu.matmul %79, %80, %cst_26 {dimension_numbers = #tpu.dot_dimension_numbers<[1], [0], [0], [1], [0, 0, 1, 1], [], []>} : vector<16x16xf32>, vector<16x32xf32>, vector<16x32xf32> -> vector<16x32xf32>
    %82 = vector.extract_strided_slice %59 {offsets = [0, 16], sizes = [16, 16], strides = [1, 1]} : vector<16x32xf32> to vector<16x16xf32>
    %83 = vector.extract_strided_slice %60 {offsets = [0, 16], sizes = [16, 16], strides = [1, 1]} : vector<16x32xf32> to vector<16x16xf32>
    %cst_27 = arith.constant dense<0.000000e+00> : vector<16x16xf32>
    %84 = tpu.matmul %82, %83, %cst_27 {dimension_numbers = #tpu.dot_dimension_numbers<[1], [1], [0], [0], [0, 0, 1, 0], [], []>} : vector<16x16xf32>, vector<16x16xf32>, vector<16x16xf32> -> vector<16x16xf32>
    %cst_28 = arith.constant 2.500000e-01 : f32
    %85 = vector.broadcast %cst_28 : f32 to vector<16x16xf32>
    %86 = arith.mulf %84, %85 : vector<16x16xf32>
    %87 = arith.addf %86, %42 : vector<16x16xf32>
    %cst_29 = arith.constant dense<0xFF800000> : vector<16xf32>
    %88 = vector.multi_reduction <maximumf>, %87, %cst_29 [1] : vector<16x16xf32> to vector<16xf32>
    %89 = vector.shape_cast %88 : vector<16xf32> to vector<16x1xf32>
    %90 = vector.broadcast %89 : vector<16x1xf32> to vector<16x16xf32>
    %91 = arith.subf %87, %90 : vector<16x16xf32>
    %92 = math.exp %91 : vector<16x16xf32>
    %cst_30 = arith.constant dense<0.000000e+00> : vector<16xf32>
    %93 = vector.multi_reduction <add>, %92, %cst_30 [1] : vector<16x16xf32> to vector<16xf32>
    %94 = vector.shape_cast %93 : vector<16xf32> to vector<16x1xf32>
    %95 = tpu.reciprocal %94 {approx = true} : vector<16x1xf32> -> vector<16x1xf32>
    %96 = vector.broadcast %95 : vector<16x1xf32> to vector<16x16xf32>
    %97 = arith.mulf %92, %96 : vector<16x16xf32>
    %98 = vector.extract_strided_slice %61 {offsets = [0, 16], sizes = [16, 16], strides = [1, 1]} : vector<16x32xf32> to vector<16x16xf32>
    %cst_31 = arith.constant dense<0.000000e+00> : vector<16x16xf32>
    %99 = tpu.matmul %97, %98, %cst_31 {dimension_numbers = #tpu.dot_dimension_numbers<[1], [0], [0], [1], [0, 0, 1, 1], [], []>} : vector<16x16xf32>, vector<16x16xf32>, vector<16x16xf32> -> vector<16x16xf32>
    %100 = vector.extract_strided_slice %44 {offsets = [16, 0], sizes = [16, 32], strides = [1, 1]} : vector<32x32xf32> to vector<16x32xf32>
    %cst_32 = arith.constant dense<0.000000e+00> : vector<16x32xf32>
    %101 = tpu.matmul %99, %100, %cst_32 {dimension_numbers = #tpu.dot_dimension_numbers<[1], [0], [0], [1], [0, 0, 1, 1], [], []>} : vector<16x16xf32>, vector<16x32xf32>, vector<16x32xf32> -> vector<16x32xf32>
    %102 = arith.addf %81, %101 : vector<16x32xf32>
    %103 = vector.broadcast %49 : vector<1x32xf32> to vector<16x32xf32>
    %104 = arith.addf %102, %103 : vector<16x32xf32>
    %105 = arith.addf %34, %104 : vector<16x32xf32>
    %cst_33 = arith.constant dense<0.000000e+00> : vector<16xf32>
    %106 = vector.multi_reduction <add>, %105, %cst_33 [1] : vector<16x32xf32> to vector<16xf32>
    %107 = vector.shape_cast %106 : vector<16xf32> to vector<16x1xf32>
    %cst_34 = arith.constant 3.200000e+01 : f32
    %108 = vector.broadcast %cst_34 : f32 to vector<16x1xf32>
    %109 = arith.divf %107, %108 : vector<16x1xf32>
    %110 = vector.broadcast %109 : vector<16x1xf32> to vector<16x32xf32>
    %111 = arith.subf %105, %110 : vector<16x32xf32>
    %112 = arith.mulf %111, %111 : vector<16x32xf32>
    %cst_35 = arith.constant dense<0.000000e+00> : vector<16xf32>
    %113 = vector.multi_reduction <add>, %112, %cst_35 [1] : vector<16x32xf32> to vector<16xf32>
    %114 = vector.shape_cast %113 : vector<16xf32> to vector<16x1xf32>
    %cst_36 = arith.constant 3.200000e+01 : f32
    %115 = vector.broadcast %cst_36 : f32 to vector<16x1xf32>
    %116 = arith.divf %114, %115 : vector<16x1xf32>
    %117 = vector.broadcast %109 : vector<16x1xf32> to vector<16x32xf32>
    %118 = arith.subf %105, %117 : vector<16x32xf32>
    %cst_37 = arith.constant 9.99999996E-13 : f32
    %119 = vector.broadcast %cst_37 : f32 to vector<16x1xf32>
    %120 = arith.addf %116, %119 : vector<16x1xf32>
    %121 = math.rsqrt %120 : vector<16x1xf32>
    %122 = vector.broadcast %121 : vector<16x1xf32> to vector<16x32xf32>
    %123 = arith.mulf %118, %122 : vector<16x32xf32>
    %124 = vector.broadcast %50 : vector<1x32xf32> to vector<16x32xf32>
    %125 = arith.mulf %123, %124 : vector<16x32xf32>
    %126 = vector.broadcast %51 : vector<1x32xf32> to vector<16x32xf32>
    %127 = arith.addf %125, %126 : vector<16x32xf32>
    %cst_38 = arith.constant dense<0.000000e+00> : vector<16x128xf32>
    %128 = tpu.matmul %127, %45, %cst_38 {dimension_numbers = #tpu.dot_dimension_numbers<[1], [0], [0], [1], [0, 0, 1, 1], [], []>} : vector<16x32xf32>, vector<32x128xf32>, vector<16x128xf32> -> vector<16x128xf32>
    %129 = vector.broadcast %52 : vector<1x128xf32> to vector<16x128xf32>
    %130 = arith.addf %128, %129 : vector<16x128xf32>
    %131 = arith.mulf %130, %130 : vector<16x128xf32>
    %132 = arith.mulf %130, %131 : vector<16x128xf32>
    %cst_39 = arith.constant 4.471500e-02 : f32
    %133 = vector.broadcast %cst_39 : f32 to vector<16x128xf32>
    %134 = arith.mulf %133, %132 : vector<16x128xf32>
    %135 = arith.addf %130, %134 : vector<16x128xf32>
    %cst_40 = arith.constant 0.797884583 : f32
    %136 = vector.broadcast %cst_40 : f32 to vector<16x128xf32>
    %137 = arith.mulf %136, %135 : vector<16x128xf32>
    %138 = math.tanh %137 : vector<16x128xf32>
    %cst_41 = arith.constant 1.000000e+00 : f32
    %139 = vector.broadcast %cst_41 : f32 to vector<16x128xf32>
    %140 = arith.addf %139, %138 : vector<16x128xf32>
    %cst_42 = arith.constant 5.000000e-01 : f32
    %141 = vector.broadcast %cst_42 : f32 to vector<16x128xf32>
    %142 = arith.mulf %141, %140 : vector<16x128xf32>
    %143 = arith.mulf %130, %142 : vector<16x128xf32>
    %cst_43 = arith.constant dense<0.000000e+00> : vector<16x32xf32>
    %144 = tpu.matmul %143, %46, %cst_43 {dimension_numbers = #tpu.dot_dimension_numbers<[1], [0], [0], [1], [0, 0, 1, 1], [], []>} : vector<16x128xf32>, vector<128x32xf32>, vector<16x32xf32> -> vector<16x32xf32>
    %145 = vector.broadcast %53 : vector<1x32xf32> to vector<16x32xf32>
    %146 = arith.addf %144, %145 : vector<16x32xf32>
    %147 = arith.addf %127, %146 : vector<16x32xf32>
    %cst_44 = arith.constant dense<0.000000e+00> : vector<16xf32>
    %148 = vector.multi_reduction <add>, %147, %cst_44 [1] : vector<16x32xf32> to vector<16xf32>
    %149 = vector.shape_cast %148 : vector<16xf32> to vector<16x1xf32>
    %cst_45 = arith.constant 3.200000e+01 : f32
    %150 = vector.broadcast %cst_45 : f32 to vector<16x1xf32>
    %151 = arith.divf %149, %150 : vector<16x1xf32>
    %152 = vector.broadcast %151 : vector<16x1xf32> to vector<16x32xf32>
    %153 = arith.subf %147, %152 : vector<16x32xf32>
    %154 = arith.mulf %153, %153 : vector<16x32xf32>
    %cst_46 = arith.constant dense<0.000000e+00> : vector<16xf32>
    %155 = vector.multi_reduction <add>, %154, %cst_46 [1] : vector<16x32xf32> to vector<16xf32>
    %156 = vector.shape_cast %155 : vector<16xf32> to vector<16x1xf32>
    %cst_47 = arith.constant 3.200000e+01 : f32
    %157 = vector.broadcast %cst_47 : f32 to vector<16x1xf32>
    %158 = arith.divf %156, %157 : vector<16x1xf32>
    %159 = vector.broadcast %151 : vector<16x1xf32> to vector<16x32xf32>
    %160 = arith.subf %147, %159 : vector<16x32xf32>
    %cst_48 = arith.constant 9.99999996E-13 : f32
    %161 = vector.broadcast %cst_48 : f32 to vector<16x1xf32>
    %162 = arith.addf %158, %161 : vector<16x1xf32>
    %163 = math.rsqrt %162 : vector<16x1xf32>
    %164 = vector.broadcast %163 : vector<16x1xf32> to vector<16x32xf32>
    %165 = arith.mulf %160, %164 : vector<16x32xf32>
    %166 = vector.broadcast %54 : vector<1x32xf32> to vector<16x32xf32>
    %167 = arith.mulf %165, %166 : vector<16x32xf32>
    %168 = vector.broadcast %55 : vector<1x32xf32> to vector<16x32xf32>
    %169 = arith.addf %167, %168 : vector<16x32xf32>
    %c336 = arith.constant 336 : index
    %c0_49 = arith.constant 0 : index
    %170 = vector.load %arg2[%c336, %c0_49] : memref<672x128xf32, #tpu.memory_space<vmem>>, vector<32x96xf32>
    %c368 = arith.constant 368 : index
    %c0_50 = arith.constant 0 : index
    %171 = vector.load %arg2[%c368, %c0_50] : memref<672x128xf32, #tpu.memory_space<vmem>>, vector<32x32xf32>
    %c400 = arith.constant 400 : index
    %c0_51 = arith.constant 0 : index
    %172 = vector.load %arg2[%c400, %c0_51] : memref<672x128xf32, #tpu.memory_space<vmem>>, vector<32x128xf32>
    %c432 = arith.constant 432 : index
    %c0_52 = arith.constant 0 : index
    %173 = vector.load %arg2[%c432, %c0_52] : memref<672x128xf32, #tpu.memory_space<vmem>>, vector<128x32xf32>
    %c560 = arith.constant 560 : index
    %c0_53 = arith.constant 0 : index
    %174 = vector.load %arg2[%c560, %c0_53] : memref<672x128xf32, #tpu.memory_space<vmem>>, vector<8x128xf32>
    %175 = vector.extract_strided_slice %174 {offsets = [0, 0], sizes = [1, 96], strides = [1, 1]} : vector<8x128xf32> to vector<1x96xf32>
    %176 = vector.extract_strided_slice %174 {offsets = [1, 0], sizes = [1, 32], strides = [1, 1]} : vector<8x128xf32> to vector<1x32xf32>
    %177 = vector.extract_strided_slice %174 {offsets = [2, 0], sizes = [1, 32], strides = [1, 1]} : vector<8x128xf32> to vector<1x32xf32>
    %178 = vector.extract_strided_slice %174 {offsets = [3, 0], sizes = [1, 32], strides = [1, 1]} : vector<8x128xf32> to vector<1x32xf32>
    %179 = vector.extract_strided_slice %174 {offsets = [4, 0], sizes = [1, 128], strides = [1, 1]} : vector<8x128xf32> to vector<1x128xf32>
    %180 = vector.extract_strided_slice %174 {offsets = [5, 0], sizes = [1, 32], strides = [1, 1]} : vector<8x128xf32> to vector<1x32xf32>
    %181 = vector.extract_strided_slice %174 {offsets = [6, 0], sizes = [1, 32], strides = [1, 1]} : vector<8x128xf32> to vector<1x32xf32>
    %182 = vector.extract_strided_slice %174 {offsets = [7, 0], sizes = [1, 32], strides = [1, 1]} : vector<8x128xf32> to vector<1x32xf32>
    %cst_54 = arith.constant dense<0.000000e+00> : vector<16x96xf32>
    %183 = tpu.matmul %169, %170, %cst_54 {dimension_numbers = #tpu.dot_dimension_numbers<[1], [0], [0], [1], [0, 0, 1, 1], [], []>} : vector<16x32xf32>, vector<32x96xf32>, vector<16x96xf32> -> vector<16x96xf32>
    %184 = vector.broadcast %175 : vector<1x96xf32> to vector<16x96xf32>
    %185 = arith.addf %183, %184 : vector<16x96xf32>
    %186 = vector.extract_strided_slice %185 {offsets = [0, 0], sizes = [16, 32], strides = [1, 1]} : vector<16x96xf32> to vector<16x32xf32>
    %187 = vector.extract_strided_slice %185 {offsets = [0, 32], sizes = [16, 32], strides = [1, 1]} : vector<16x96xf32> to vector<16x32xf32>
    %188 = vector.extract_strided_slice %185 {offsets = [0, 64], sizes = [16, 32], strides = [1, 1]} : vector<16x96xf32> to vector<16x32xf32>
    %189 = vector.extract_strided_slice %186 {offsets = [0, 0], sizes = [16, 16], strides = [1, 1]} : vector<16x32xf32> to vector<16x16xf32>
    %190 = vector.extract_strided_slice %187 {offsets = [0, 0], sizes = [16, 16], strides = [1, 1]} : vector<16x32xf32> to vector<16x16xf32>
    %cst_55 = arith.constant dense<0.000000e+00> : vector<16x16xf32>
    %191 = tpu.matmul %189, %190, %cst_55 {dimension_numbers = #tpu.dot_dimension_numbers<[1], [1], [0], [0], [0, 0, 1, 0], [], []>} : vector<16x16xf32>, vector<16x16xf32>, vector<16x16xf32> -> vector<16x16xf32>
    %cst_56 = arith.constant 2.500000e-01 : f32
    %192 = vector.broadcast %cst_56 : f32 to vector<16x16xf32>
    %193 = arith.mulf %191, %192 : vector<16x16xf32>
    %194 = arith.addf %193, %42 : vector<16x16xf32>
    %cst_57 = arith.constant dense<0xFF800000> : vector<16xf32>
    %195 = vector.multi_reduction <maximumf>, %194, %cst_57 [1] : vector<16x16xf32> to vector<16xf32>
    %196 = vector.shape_cast %195 : vector<16xf32> to vector<16x1xf32>
    %197 = vector.broadcast %196 : vector<16x1xf32> to vector<16x16xf32>
    %198 = arith.subf %194, %197 : vector<16x16xf32>
    %199 = math.exp %198 : vector<16x16xf32>
    %cst_58 = arith.constant dense<0.000000e+00> : vector<16xf32>
    %200 = vector.multi_reduction <add>, %199, %cst_58 [1] : vector<16x16xf32> to vector<16xf32>
    %201 = vector.shape_cast %200 : vector<16xf32> to vector<16x1xf32>
    %202 = tpu.reciprocal %201 {approx = true} : vector<16x1xf32> -> vector<16x1xf32>
    %203 = vector.broadcast %202 : vector<16x1xf32> to vector<16x16xf32>
    %204 = arith.mulf %199, %203 : vector<16x16xf32>
    %205 = vector.extract_strided_slice %188 {offsets = [0, 0], sizes = [16, 16], strides = [1, 1]} : vector<16x32xf32> to vector<16x16xf32>
    %cst_59 = arith.constant dense<0.000000e+00> : vector<16x16xf32>
    %206 = tpu.matmul %204, %205, %cst_59 {dimension_numbers = #tpu.dot_dimension_numbers<[1], [0], [0], [1], [0, 0, 1, 1], [], []>} : vector<16x16xf32>, vector<16x16xf32>, vector<16x16xf32> -> vector<16x16xf32>
    %207 = vector.extract_strided_slice %171 {offsets = [0, 0], sizes = [16, 32], strides = [1, 1]} : vector<32x32xf32> to vector<16x32xf32>
    %cst_60 = arith.constant dense<0.000000e+00> : vector<16x32xf32>
    %208 = tpu.matmul %206, %207, %cst_60 {dimension_numbers = #tpu.dot_dimension_numbers<[1], [0], [0], [1], [0, 0, 1, 1], [], []>} : vector<16x16xf32>, vector<16x32xf32>, vector<16x32xf32> -> vector<16x32xf32>
    %209 = vector.extract_strided_slice %186 {offsets = [0, 16], sizes = [16, 16], strides = [1, 1]} : vector<16x32xf32> to vector<16x16xf32>
    %210 = vector.extract_strided_slice %187 {offsets = [0, 16], sizes = [16, 16], strides = [1, 1]} : vector<16x32xf32> to vector<16x16xf32>
    %cst_61 = arith.constant dense<0.000000e+00> : vector<16x16xf32>
    %211 = tpu.matmul %209, %210, %cst_61 {dimension_numbers = #tpu.dot_dimension_numbers<[1], [1], [0], [0], [0, 0, 1, 0], [], []>} : vector<16x16xf32>, vector<16x16xf32>, vector<16x16xf32> -> vector<16x16xf32>
    %cst_62 = arith.constant 2.500000e-01 : f32
    %212 = vector.broadcast %cst_62 : f32 to vector<16x16xf32>
    %213 = arith.mulf %211, %212 : vector<16x16xf32>
    %214 = arith.addf %213, %42 : vector<16x16xf32>
    %cst_63 = arith.constant dense<0xFF800000> : vector<16xf32>
    %215 = vector.multi_reduction <maximumf>, %214, %cst_63 [1] : vector<16x16xf32> to vector<16xf32>
    %216 = vector.shape_cast %215 : vector<16xf32> to vector<16x1xf32>
    %217 = vector.broadcast %216 : vector<16x1xf32> to vector<16x16xf32>
    %218 = arith.subf %214, %217 : vector<16x16xf32>
    %219 = math.exp %218 : vector<16x16xf32>
    %cst_64 = arith.constant dense<0.000000e+00> : vector<16xf32>
    %220 = vector.multi_reduction <add>, %219, %cst_64 [1] : vector<16x16xf32> to vector<16xf32>
    %221 = vector.shape_cast %220 : vector<16xf32> to vector<16x1xf32>
    %222 = tpu.reciprocal %221 {approx = true} : vector<16x1xf32> -> vector<16x1xf32>
    %223 = vector.broadcast %222 : vector<16x1xf32> to vector<16x16xf32>
    %224 = arith.mulf %219, %223 : vector<16x16xf32>
    %225 = vector.extract_strided_slice %188 {offsets = [0, 16], sizes = [16, 16], strides = [1, 1]} : vector<16x32xf32> to vector<16x16xf32>
    %cst_65 = arith.constant dense<0.000000e+00> : vector<16x16xf32>
    %226 = tpu.matmul %224, %225, %cst_65 {dimension_numbers = #tpu.dot_dimension_numbers<[1], [0], [0], [1], [0, 0, 1, 1], [], []>} : vector<16x16xf32>, vector<16x16xf32>, vector<16x16xf32> -> vector<16x16xf32>
    %227 = vector.extract_strided_slice %171 {offsets = [16, 0], sizes = [16, 32], strides = [1, 1]} : vector<32x32xf32> to vector<16x32xf32>
    %cst_66 = arith.constant dense<0.000000e+00> : vector<16x32xf32>
    %228 = tpu.matmul %226, %227, %cst_66 {dimension_numbers = #tpu.dot_dimension_numbers<[1], [0], [0], [1], [0, 0, 1, 1], [], []>} : vector<16x16xf32>, vector<16x32xf32>, vector<16x32xf32> -> vector<16x32xf32>
    %229 = arith.addf %208, %228 : vector<16x32xf32>
    %230 = vector.broadcast %176 : vector<1x32xf32> to vector<16x32xf32>
    %231 = arith.addf %229, %230 : vector<16x32xf32>
    %232 = arith.addf %169, %231 : vector<16x32xf32>
    %cst_67 = arith.constant dense<0.000000e+00> : vector<16xf32>
    %233 = vector.multi_reduction <add>, %232, %cst_67 [1] : vector<16x32xf32> to vector<16xf32>
    %234 = vector.shape_cast %233 : vector<16xf32> to vector<16x1xf32>
    %cst_68 = arith.constant 3.200000e+01 : f32
    %235 = vector.broadcast %cst_68 : f32 to vector<16x1xf32>
    %236 = arith.divf %234, %235 : vector<16x1xf32>
    %237 = vector.broadcast %236 : vector<16x1xf32> to vector<16x32xf32>
    %238 = arith.subf %232, %237 : vector<16x32xf32>
    %239 = arith.mulf %238, %238 : vector<16x32xf32>
    %cst_69 = arith.constant dense<0.000000e+00> : vector<16xf32>
    %240 = vector.multi_reduction <add>, %239, %cst_69 [1] : vector<16x32xf32> to vector<16xf32>
    %241 = vector.shape_cast %240 : vector<16xf32> to vector<16x1xf32>
    %cst_70 = arith.constant 3.200000e+01 : f32
    %242 = vector.broadcast %cst_70 : f32 to vector<16x1xf32>
    %243 = arith.divf %241, %242 : vector<16x1xf32>
    %244 = vector.broadcast %236 : vector<16x1xf32> to vector<16x32xf32>
    %245 = arith.subf %232, %244 : vector<16x32xf32>
    %cst_71 = arith.constant 9.99999996E-13 : f32
    %246 = vector.broadcast %cst_71 : f32 to vector<16x1xf32>
    %247 = arith.addf %243, %246 : vector<16x1xf32>
    %248 = math.rsqrt %247 : vector<16x1xf32>
    %249 = vector.broadcast %248 : vector<16x1xf32> to vector<16x32xf32>
    %250 = arith.mulf %245, %249 : vector<16x32xf32>
    %251 = vector.broadcast %177 : vector<1x32xf32> to vector<16x32xf32>
    %252 = arith.mulf %250, %251 : vector<16x32xf32>
    %253 = vector.broadcast %178 : vector<1x32xf32> to vector<16x32xf32>
    %254 = arith.addf %252, %253 : vector<16x32xf32>
    %cst_72 = arith.constant dense<0.000000e+00> : vector<16x128xf32>
    %255 = tpu.matmul %254, %172, %cst_72 {dimension_numbers = #tpu.dot_dimension_numbers<[1], [0], [0], [1], [0, 0, 1, 1], [], []>} : vector<16x32xf32>, vector<32x128xf32>, vector<16x128xf32> -> vector<16x128xf32>
    %256 = vector.broadcast %179 : vector<1x128xf32> to vector<16x128xf32>
    %257 = arith.addf %255, %256 : vector<16x128xf32>
    %258 = arith.mulf %257, %257 : vector<16x128xf32>
    %259 = arith.mulf %257, %258 : vector<16x128xf32>
    %cst_73 = arith.constant 4.471500e-02 : f32
    %260 = vector.broadcast %cst_73 : f32 to vector<16x128xf32>
    %261 = arith.mulf %260, %259 : vector<16x128xf32>
    %262 = arith.addf %257, %261 : vector<16x128xf32>
    %cst_74 = arith.constant 0.797884583 : f32
    %263 = vector.broadcast %cst_74 : f32 to vector<16x128xf32>
    %264 = arith.mulf %263, %262 : vector<16x128xf32>
    %265 = math.tanh %264 : vector<16x128xf32>
    %cst_75 = arith.constant 1.000000e+00 : f32
    %266 = vector.broadcast %cst_75 : f32 to vector<16x128xf32>
    %267 = arith.addf %266, %265 : vector<16x128xf32>
    %cst_76 = arith.constant 5.000000e-01 : f32
    %268 = vector.broadcast %cst_76 : f32 to vector<16x128xf32>
    %269 = arith.mulf %268, %267 : vector<16x128xf32>
    %270 = arith.mulf %257, %269 : vector<16x128xf32>
    %cst_77 = arith.constant dense<0.000000e+00> : vector<16x32xf32>
    %271 = tpu.matmul %270, %173, %cst_77 {dimension_numbers = #tpu.dot_dimension_numbers<[1], [0], [0], [1], [0, 0, 1, 1], [], []>} : vector<16x128xf32>, vector<128x32xf32>, vector<16x32xf32> -> vector<16x32xf32>
    %272 = vector.broadcast %180 : vector<1x32xf32> to vector<16x32xf32>
    %273 = arith.addf %271, %272 : vector<16x32xf32>
    %274 = arith.addf %254, %273 : vector<16x32xf32>
    %cst_78 = arith.constant dense<0.000000e+00> : vector<16xf32>
    %275 = vector.multi_reduction <add>, %274, %cst_78 [1] : vector<16x32xf32> to vector<16xf32>
    %276 = vector.shape_cast %275 : vector<16xf32> to vector<16x1xf32>
    %cst_79 = arith.constant 3.200000e+01 : f32
    %277 = vector.broadcast %cst_79 : f32 to vector<16x1xf32>
    %278 = arith.divf %276, %277 : vector<16x1xf32>
    %279 = vector.broadcast %278 : vector<16x1xf32> to vector<16x32xf32>
    %280 = arith.subf %274, %279 : vector<16x32xf32>
    %281 = arith.mulf %280, %280 : vector<16x32xf32>
    %cst_80 = arith.constant dense<0.000000e+00> : vector<16xf32>
    %282 = vector.multi_reduction <add>, %281, %cst_80 [1] : vector<16x32xf32> to vector<16xf32>
    %283 = vector.shape_cast %282 : vector<16xf32> to vector<16x1xf32>
    %cst_81 = arith.constant 3.200000e+01 : f32
    %284 = vector.broadcast %cst_81 : f32 to vector<16x1xf32>
    %285 = arith.divf %283, %284 : vector<16x1xf32>
    %286 = vector.broadcast %278 : vector<16x1xf32> to vector<16x32xf32>
    %287 = arith.subf %274, %286 : vector<16x32xf32>
    %cst_82 = arith.constant 9.99999996E-13 : f32
    %288 = vector.broadcast %cst_82 : f32 to vector<16x1xf32>
    %289 = arith.addf %285, %288 : vector<16x1xf32>
    %290 = math.rsqrt %289 : vector<16x1xf32>
    %291 = vector.broadcast %290 : vector<16x1xf32> to vector<16x32xf32>
    %292 = arith.mulf %287, %291 : vector<16x32xf32>
    %293 = vector.broadcast %181 : vector<1x32xf32> to vector<16x32xf32>
    %294 = arith.mulf %292, %293 : vector<16x32xf32>
    %295 = vector.broadcast %182 : vector<1x32xf32> to vector<16x32xf32>
    %296 = arith.addf %294, %295 : vector<16x32xf32>
    %c568 = arith.constant 568 : index
    %c0_83 = arith.constant 0 : index
    %297 = vector.load %arg2[%c568, %c0_83] : memref<672x128xf32, #tpu.memory_space<vmem>>, vector<32x32xf32>
    %c600 = arith.constant 600 : index
    %c0_84 = arith.constant 0 : index
    %298 = vector.load %arg2[%c600, %c0_84] : memref<672x128xf32, #tpu.memory_space<vmem>>, vector<32x32xf32>
    %c632 = arith.constant 632 : index
    %c0_85 = arith.constant 0 : index
    %299 = vector.load %arg2[%c632, %c0_85] : memref<672x128xf32, #tpu.memory_space<vmem>>, vector<32x128xf32>
    %c664 = arith.constant 664 : index
    %c0_86 = arith.constant 0 : index
    %300 = vector.load %arg2[%c664, %c0_86] : memref<672x128xf32, #tpu.memory_space<vmem>>, vector<3x128xf32>
    %301 = vector.extract_strided_slice %300 {offsets = [0, 0], sizes = [1, 32], strides = [1, 1]} : vector<3x128xf32> to vector<1x32xf32>
    %302 = vector.extract_strided_slice %300 {offsets = [1, 0], sizes = [1, 32], strides = [1, 1]} : vector<3x128xf32> to vector<1x32xf32>
    %303 = vector.extract_strided_slice %300 {offsets = [2, 0], sizes = [1, 128], strides = [1, 1]} : vector<3x128xf32> to vector<1x128xf32>
    %cst_87 = arith.constant dense<0.000000e+00> : vector<16x32xf32>
    %304 = tpu.matmul %296, %297, %cst_87 {dimension_numbers = #tpu.dot_dimension_numbers<[1], [0], [0], [1], [0, 0, 1, 1], [], []>} : vector<16x32xf32>, vector<32x32xf32>, vector<16x32xf32> -> vector<16x32xf32>
    %305 = vector.broadcast %301 : vector<1x32xf32> to vector<16x32xf32>
    %306 = arith.addf %304, %305 : vector<16x32xf32>
    %cst_88 = arith.constant 0.000000e+00 : f32
    %307 = vector.broadcast %cst_88 : f32 to vector<16x32xf32>
    %308 = arith.maximumf %306, %307 : vector<16x32xf32>
    %cst_89 = arith.constant dense<0.000000e+00> : vector<16x32xf32>
    %309 = tpu.matmul %308, %298, %cst_89 {dimension_numbers = #tpu.dot_dimension_numbers<[1], [0], [0], [1], [0, 0, 1, 1], [], []>} : vector<16x32xf32>, vector<32x32xf32>, vector<16x32xf32> -> vector<16x32xf32>
    %310 = vector.broadcast %302 : vector<1x32xf32> to vector<16x32xf32>
    %311 = arith.addf %309, %310 : vector<16x32xf32>
    %cst_90 = arith.constant 0.000000e+00 : f32
    %312 = vector.broadcast %cst_90 : f32 to vector<16x32xf32>
    %313 = arith.maximumf %311, %312 : vector<16x32xf32>
    %cst_91 = arith.constant dense<0.000000e+00> : vector<16x32xf32>
    %314 = tpu.matmul %313, %298, %cst_91 {dimension_numbers = #tpu.dot_dimension_numbers<[1], [0], [0], [1], [0, 0, 1, 1], [], []>} : vector<16x32xf32>, vector<32x32xf32>, vector<16x32xf32> -> vector<16x32xf32>
    %315 = vector.broadcast %302 : vector<1x32xf32> to vector<16x32xf32>
    %316 = arith.addf %314, %315 : vector<16x32xf32>
    %cst_92 = arith.constant dense<0.000000e+00> : vector<16x128xf32>
    %317 = tpu.matmul %316, %299, %cst_92 {dimension_numbers = #tpu.dot_dimension_numbers<[1], [0], [0], [1], [0, 0, 1, 1], [], []>} : vector<16x32xf32>, vector<32x128xf32>, vector<16x128xf32> -> vector<16x128xf32>
    %318 = vector.broadcast %303 : vector<1x128xf32> to vector<16x128xf32>
    %319 = arith.addf %317, %318 : vector<16x128xf32>
    %320 = vector.extract_strided_slice %319 {offsets = [0, 0], sizes = [1, 128], strides = [1, 1]} : vector<16x128xf32> to vector<1x128xf32>
    %c0_93 = arith.constant 0 : index
    %c0_94 = arith.constant 0 : index
    %321 = vector.load %arg3[%c0_93, %c0_94] : memref<2x128xf32, #tpu.memory_space<vmem>>, vector<1x128xf32>
    tpu.vector_store %arg3[%c0_93, %c0_94], %320 {strides = array<i32>} : memref<2x128xf32, #tpu.memory_space<vmem>>, vector<1x128xf32>,
    %322 = vector.extract_strided_slice %319 {offsets = [8, 0], sizes = [1, 128], strides = [1, 1]} : vector<16x128xf32> to vector<1x128xf32>
    %c1 = arith.constant 1 : index
    %c0_95 = arith.constant 0 : index
    %323 = vector.load %arg3[%c1, %c0_95] : memref<2x128xf32, #tpu.memory_space<vmem>>, vector<1x128xf32>
    tpu.vector_store %arg3[%c1, %c0_95], %322 {strides = array<i32>} : memref<2x128xf32, #tpu.memory_space<vmem>>, vector<1x128xf32>,
    return
  }
}

</mosaic_0001>

<llo_original>
// kernel: forward.1
$region0: #{forward.1}
  #allocation0 [shape = 'u32[]', space=smem, size = 0x4, offset = 0x4, fixed_abs, tag = 'smem constant byte address 0x4 - core index']
  #allocation1 [shape = 'u32[144,128]{1,0:T(1,128)}', space=vmem, size = 0x12000, scoped, tag = 'internal scratch']
  %s0 = inlined_call_operand.vmem [shape: s32[16,1], index: 0, kind: input, shape index: {}]
  %s1 = inlined_call_operand.vmem [shape: f32[1,16], index: 1, kind: input, shape index: {}]
  %s2 = inlined_call_operand.hbm [shape: f32[672,128], index: 2, kind: input, shape index: {}]
  %s3 = inlined_call_operand.hbm [shape: f32[2,128], index: 3, kind: output, shape index: {}]
  %s4 = sld [smem:[#allocation0]]
  $region26: #{forward.1} parent=0
    _
  %s6 = ssub.s32 1, %s4
  %s7 = scalar_select 0, %s6, %s4
  $region1: #{forward.1} parent=0
    #allocation2 [shape = 'u8[344064]{0}', space=vmem, size = 0x54000, scoped, tag = 'input window, operand 2, single buffered']
    #allocation3 [shape = 's32[1]{0}', space=sflag, size = 0x4, scoped, tag = 'scoped memory for forward.1']
    #allocation4 [shape = 's32[1]{0}', space=sflag, size = 0x4, scoped, tag = 'scoped memory for forward.1']
    #allocation5 [shape = 'u8[1024]{0}', space=vmem, size = 0x400, scoped, tag = 'output window, operand 0, single buffered']
    %8 = vsyncpa [#allocation3], 0
    %9 = vsyncpa [#allocation4], 0
    // Predicated region
    $region2: #{forward.1} parent=1 // pred_check
      _
    $region3: #{forward.1} parent=1 // pred_check_branch
      %11 = sbr.rel (0) target = $region5
    $region4: #{forward.1} parent=1 // pred_region
      _
    $region5: #{forward.1} parent=1 // pred_fallthru
      _
    // Predicated region
    $region6: #{forward.1} parent=1 // pred_check
      _
    $region7: #{forward.1} parent=1 // pred_check_branch
      %13 = sbr.rel (0) target = $region9
    $region8: #{forward.1} parent=1 // pred_region
      _
    $region9: #{forward.1} parent=1 // pred_fallthru
      _
    // Predicated region
    $region10: #{forward.1} parent=1 // pred_check
      _
    $region11: #{forward.1} parent=1 // pred_check_branch
      %15 = sbr.rel (0) target = $region13
    $region12: #{forward.1} parent=1 // pred_region
      %s17 = ssub.s32 10752, 10752
      %18 = vsyncadd [#allocation3], %s17
      %s19 = sshll.u32 [#allocation2], 4
      %s20 = int_to_ptr.vmem [resolvable:$true] %s19
      %25 = dma.hbm_to_vmem [thread:$0]  %s2, 10752, %s20, [#allocation3], 128, 128, 8
    $region13: #{forward.1} parent=1 // pred_fallthru
      _
    // Predicated region
    $region14: #{forward.1} parent=1 // pred_check
      _
    $region15: #{forward.1} parent=1 // pred_check_branch
      %27 = sbr.rel (0) target = $region17
    $region16: #{forward.1} parent=1 // pred_region
      %28 = dma.done [#allocation3], 10752
    $region17: #{forward.1} parent=1 // pred_fallthru
      _
    %v29 = vld [vmem:[#allocation2] sm:$0xff]
    %v30 = vld [vmem:[#allocation2 + $0x8] sm:$0xff]
    %v31 = vld [vmem:[#allocation2 + $0x10] sm:$0xff]
    %v32 = vld [vmem:[#allocation2 + $0x18] sm:$0xff]
    %v33 = vld [vmem:[#allocation2 + $0x20] sm:$0xff]
    %v34 = vld [vmem:[#allocation2 + $0x28] sm:$0xff]
    %v35 = vld [vmem:[#allocation2 + $0x30] sm:$0xff]
    %v36 = vld [vmem:[#allocation2 + $0x38] sm:$0xff]
    %v37 = vlaneseq
    %v38 = vand.u32 %v37, 127
    %v39 = vld [vmem:[%s0] sm:$0xff]
    %v40 = vld [vmem:[%s0 + $0x8] sm:$0xff]
    %41 = vset.pattern.permute.xlu0 0
    %42 = vperm.xlu0 %41, %v39
    %v43 = vpop.permute.xlu0 %42
    %44 = vset.pattern.permute.xlu0 0
    %45 = vperm.xlu0 %44, %v40
    %v46 = vpop.permute.xlu0 %45
    %vm47 = vcmp.eq.s32.totalorder %v43, %v38
    %vm48 = vcmp.eq.s32.totalorder %v46, %v38
    %v49 = vsel %vm47, 1, 0
    %v50 = vsel %vm48, 1, 0
    %v51 = vcvt.s32.f32 %v49
    %v52 = vcvt.s32.f32 %v50
    %v53 = vld [vmem:[#allocation2 + $0x40] sm:$0xff]
    %v54 = vld [vmem:[#allocation2 + $0x48] sm:$0xff]
    %vm55 = vcmask 523264
    %v57 = vsel %vm55, %v51, 0
    %v60 = vsel %vm55, %v52, 0
    %62 = vmatprep.subr.mxu0 0.0
    %63 = vmatpush1.msra.mxu0 %v29
    %64 = vmatprep.subr.mxu0 0.0
    %65 = vmatpush1.msra.mxu0 %v30
    %66 = vmatprep.subr.mxu0 0.0
    %67 = vmatpush1.msra.mxu0 %v31
    %68 = vmatprep.subr.mxu0 0.0
    %69 = vmatpush1.msra.mxu0 %v32
    %70 = vmatprep.subr.mxu0 0.0
    %71 = vmatpush1.msra.mxu0 %v33
    %72 = vmatprep.subr.mxu0 0.0
    %73 = vmatpush1.msra.mxu0 %v34
    %74 = vmatprep.subr.mxu0 0.0
    %75 = vmatpush1.msra.mxu0 %v35
    %76 = vmatprep.subr.mxu0 0.0
    %77 = vmatpush1.msra.mxu0 %v36
    %78 = vmatprep.subr.mxu0 0.0
    %79 = vmatpush1.msra.mxu0 0.0
    %80 = vmatprep.subr.mxu0 0.0
    %81 = vmatpush1.msra.mxu0 0.0
    %82 = vmatprep.subr.mxu0 0.0
    %83 = vmatpush1.msra.mxu0 0.0
    %84 = vmatprep.subr.mxu0 0.0
    %85 = vmatpush1.msra.mxu0 0.0
    %86 = vmatprep.subr.mxu0 0.0
    %87 = vmatpush1.msra.mxu0 0.0
    %88 = vmatprep.subr.mxu0 0.0
    %89 = vmatpush1.msra.mxu0 0.0
    %90 = vmatprep.subr.mxu0 0.0
    %91 = vmatpush1.msra.mxu0 0.0
    %92 = vmatprep.subr.mxu0 0.0
    %93 = vmatpush1.msra.mxu0 0.0
    %94 = vmatprep.subr.mxu0 0.0
    %95 = vmatpush1.msra.mxu0 0.0
    %96 = vmatprep.subr.mxu0 0.0
    %97 = vmatpush1.msra.mxu0 0.0
    %98 = vmatprep.subr.mxu0 0.0
    %99 = vmatpush1.msra.mxu0 0.0
    %100 = vmatprep.subr.mxu0 0.0
    %101 = vmatpush1.msra.mxu0 0.0
    %102 = vmatprep.subr.mxu0 0.0
    %103 = vmatpush1.msra.mxu0 0.0
    %104 = vmatprep.subr.mxu0 0.0
    %105 = vmatpush1.msra.mxu0 0.0
    %106 = vmatprep.subr.mxu0 0.0
    %107 = vmatpush1.msra.mxu0 0.0
    %108 = vmatprep.subr.mxu0 0.0
    %109 = vmatpush1.msra.mxu0 0.0
    %110 = vmatprep.subr.mxu0 0.0
    %111 = vmatpush1.msra.mxu0 0.0
    %112 = vmatprep.subr.mxu0 0.0
    %113 = vmatpush1.msra.mxu0 0.0
    %114 = vmatprep.subr.mxu0 0.0
    %115 = vmatpush1.msra.mxu0 0.0
    %116 = vmatprep.subr.mxu0 0.0
    %117 = vmatpush1.msra.mxu0 0.0
    %118 = vmatprep.subr.mxu0 0.0
    %119 = vmatpush1.msra.mxu0 0.0
    %120 = vmatprep.subr.mxu0 0.0
    %121 = vmatpush1.msra.mxu0 0.0
    %122 = vmatprep.subr.mxu0 0.0
    %123 = vmatpush1.msra.mxu0 0.0
    %124 = vmatprep.subr.mxu0 0.0
    %125 = vmatpush1.msra.mxu0 0.0
    %126 = vmatprep.mubr.f32.mxu0 0.0
    %127 = vmatmul.mubr.f32.gmra.mrb[0].mxu0 %v57
    %v128 = vpop.f32.mrb[0].mxu0
    %v129 = vadd.f32 %v53, %v128
    %v130 = vpop.f32.mrb[0].mxu0
    %131 = vmatprep.mubr.f32.mxu0 0.0
    %132 = vmatmul.mubr.f32.gmra.mrb[0].mxu0 %v60
    %v133 = vpop.f32.mrb[0].mxu0
    %v134 = vadd.f32 %v54, %v133
    %v135 = vpop.f32.mrb[0].mxu0
    %136 = vdwg.mxu0
    %v137 = vld [vmem:[#allocation2 + $0x60] sm:$0x3]
    %vm138 = vcmask 261120
    %v139 = vsel %vm138, %v129, 0.0
    %140 = vadd.xlane.f32.xlu0 %v139
    %v141 = vpop.xlane.xlu0 %140
    %v142 = vsel %vm138, %v134, 0.0
    %143 = vadd.xlane.f32.xlu0 %v142
    %v144 = vpop.xlane.xlu0 %143
    %v145 = vrcp.pop 32.0
    %v146 = vmul.f32 %v141, %v145
    %v147 = vmul.f32 %v144, %v145
    %v148 = vsub.f32 %v129, %v146
    %v149 = vsub.f32 %v134, %v147
    %v150 = vmul.f32 %v148, %v148
    %v151 = vmul.f32 %v149, %v149
    %v152 = vsel %vm138, %v150, 0.0
    %153 = vadd.xlane.f32.xlu0 %v152
    %v154 = vpop.xlane.xlu0 %153
    %v155 = vsel %vm138, %v151, 0.0
    %156 = vadd.xlane.f32.xlu0 %v155
    %v157 = vpop.xlane.xlu0 %156
    %v158 = vmul.f32 %v154, %v145
    %v159 = vmul.f32 %v157, %v145
    %v160 = vadd.f32 %v158, 1e-12
    %v161 = vadd.f32 %v159, 1e-12
    %v162 = vrsqrt.pop %v160
    %v163 = vrsqrt.pop %v161
    %v164 = vmul.f32 %v148, %v162
    %v165 = vmul.f32 %v149, %v163
    %v166 = vlaneseq
    %v167 = vshrl.u32 %v166, 7
    %v168 = vsub.s32 0, %v167
    %v169 = vrot.slane %v137, %v168
    %v170 = vmul.f32 %v164, %v169
    %v171 = vmul.f32 %v165, %v169
    %v172 = vlaneseq
    %v173 = vshrl.u32 %v172, 7
    %v174 = vsub.s32 1, %v173
    %v175 = vrot.slane %v137, %v174
    %v176 = vadd.f32 %v170, %v175
    %v177 = vadd.f32 %v171, %v175
    %v178 = vld [vmem:[#allocation2 + $0x50] sm:$0xff]
    %v179 = vld [vmem:[#allocation2 + $0x58] sm:$0xff]
    %v180 = vld [vmem:[%s1] sm:$0x1]
    %v181 = vsub.f32 1.0, %v180
    %v182 = vmul.f32 %v181, -1e+09
    %v184 = vlaneseq
    %v185 = vshrl.u32 %v184, 7
    %v186 = vsub.s32 0, %v185
    %v187 = vrot.slane %v182, %v186
    %v189 = vadd.f32 %v178, %v187
    %v190 = vadd.f32 %v179, %v187
    %v191 = vld [vmem:[#allocation2 + $0x68] sm:$0xff]
    %v192 = vld [vmem:[#allocation2 + $0x70] sm:$0xff]
    %v193 = vld [vmem:[#allocation2 + $0x78] sm:$0xff]
    %v194 = vld [vmem:[#allocation2 + $0x80] sm:$0xff]
    %v195 = vld [vmem:[#allocation2 + $0x88] sm:$0xff]
    %v196 = vld [vmem:[#allocation2 + $0x90] sm:$0xff]
    %v197 = vld [vmem:[#allocation2 + $0x98] sm:$0xff]
    %v198 = vld [vmem:[#allocation2 + $0xa0] sm:$0xff]
    %v199 = vld [vmem:[#allocation2 + $0xa8] sm:$0xff]
    %v200 = vld [vmem:[#allocation2 + $0xb0] sm:$0xff]
    %v201 = vld [vmem:[#allocation2 + $0xb8] sm:$0xff]
    %v202 = vld [vmem:[#allocation2 + $0xc0] sm:$0xff]
    %v203 = vld [vmem:[#allocation2 + $0xc8] sm:$0xff]
    %v204 = vld [vmem:[#allocation2 + $0xd0] sm:$0xff]
    %v205 = vld [vmem:[#allocation2 + $0xd8] sm:$0xff]
    %v206 = vld [vmem:[#allocation2 + $0xe0] sm:$0xff]
    %v207 = vld [vmem:[#allocation2 + $0xe8] sm:$0xff]
    %v208 = vld [vmem:[#allocation2 + $0xf0] sm:$0xff]
    %v209 = vld [vmem:[#allocation2 + $0xf8] sm:$0xff]
    %v210 = vld [vmem:[#allocation2 + $0x100] sm:$0xff]
    %v211 = vld [vmem:[#allocation2 + $0x108] sm:$0xff]
    %v212 = vld [vmem:[#allocation2 + $0x110] sm:$0xff]
    %v213 = vld [vmem:[#allocation2 + $0x118] sm:$0xff]
    %v214 = vld [vmem:[#allocation2 + $0x120] sm:$0xff]
    %v215 = vld [vmem:[#allocation2 + $0x128] sm:$0xff]
    %v216 = vld [vmem:[#allocation2 + $0x130] sm:$0xff]
    %v217 = vld [vmem:[#allocation2 + $0x138] sm:$0xff]
    %v218 = vld [vmem:[#allocation2 + $0x140] sm:$0xff]
    %v219 = vld [vmem:[#allocation2 + $0x148] sm:$0xff]
    %v220 = vlaneseq
    %v221 = vshrl.u32 %v220, 7
    %v222 = vsub.s32 0, %v221
    %v223 = vrot.slane %v219, %v222
    %v225 = vsel %vm138, %v176, 0
    %v228 = vsel %vm138, %v177, 0
    %230 = vmatprep.subr.mxu0 0.0
    %231 = vmatpush1.msra.mxu0 %v191
    %232 = vmatprep.subr.mxu0 0.0
    %233 = vmatpush1.msra.mxu0 %v192
    %234 = vmatprep.subr.mxu0 0.0
    %235 = vmatpush1.msra.mxu0 %v193
    %236 = vmatprep.subr.mxu0 0.0
    %237 = vmatpush1.msra.mxu0 %v194
    %238 = vmatprep.subr.mxu0 0.0
    %239 = vmatpush1.msra.mxu0 0.0
    %240 = vmatprep.subr.mxu0 0.0
    %241 = vmatpush1.msra.mxu0 0.0
    %242 = vmatprep.subr.mxu0 0.0
    %243 = vmatpush1.msra.mxu0 0.0
    %244 = vmatprep.subr.mxu0 0.0
    %245 = vmatpush1.msra.mxu0 0.0
    %246 = vmatprep.subr.mxu0 0.0
    %247 = vmatpush1.msra.mxu0 0.0
    %248 = vmatprep.subr.mxu0 0.0
    %249 = vmatpush1.msra.mxu0 0.0
    %250 = vmatprep.subr.mxu0 0.0
    %251 = vmatpush1.msra.mxu0 0.0
    %252 = vmatprep.subr.mxu0 0.0
    %253 = vmatpush1.msra.mxu0 0.0
    %254 = vmatprep.subr.mxu0 0.0
    %255 = vmatpush1.msra.mxu0 0.0
    %256 = vmatprep.subr.mxu0 0.0
    %257 = vmatpush1.msra.mxu0 0.0
    %258 = vmatprep.subr.mxu0 0.0
    %259 = vmatpush1.msra.mxu0 0.0
    %260 = vmatprep.subr.mxu0 0.0
    %261 = vmatpush1.msra.mxu0 0.0
    %262 = vmatprep.subr.mxu0 0.0
    %263 = vmatpush1.msra.mxu0 0.0
    %264 = vmatprep.subr.mxu0 0.0
    %265 = vmatpush1.msra.mxu0 0.0
    %266 = vmatprep.subr.mxu0 0.0
    %267 = vmatpush1.msra.mxu0 0.0
    %268 = vmatprep.subr.mxu0 0.0
    %269 = vmatpush1.msra.mxu0 0.0
    %270 = vmatprep.subr.mxu0 0.0
    %271 = vmatpush1.msra.mxu0 0.0
    %272 = vmatprep.subr.mxu0 0.0
    %273 = vmatpush1.msra.mxu0 0.0
    %274 = vmatprep.subr.mxu0 0.0
    %275 = vmatpush1.msra.mxu0 0.0
    %276 = vmatprep.subr.mxu0 0.0
    %277 = vmatpush1.msra.mxu0 0.0
    %278 = vmatprep.subr.mxu0 0.0
    %279 = vmatpush1.msra.mxu0 0.0
    %280 = vmatprep.subr.mxu0 0.0
    %281 = vmatpush1.msra.mxu0 0.0
    %282 = vmatprep.subr.mxu0 0.0
    %283 = vmatpush1.msra.mxu0 0.0
    %284 = vmatprep.subr.mxu0 0.0
    %285 = vmatpush1.msra.mxu0 0.0
    %286 = vmatprep.subr.mxu0 0.0
    %287 = vmatpush1.msra.mxu0 0.0
    %288 = vmatprep.subr.mxu0 0.0
    %289 = vmatpush1.msra.mxu0 0.0
    %290 = vmatprep.subr.mxu0 0.0
    %291 = vmatpush1.msra.mxu0 0.0
    %292 = vmatprep.subr.mxu0 0.0
    %293 = vmatpush1.msra.mxu0 0.0
    %294 = vmatprep.mubr.f32.mxu0 0.0
    %295 = vmatmul.mubr.f32.gmra.mrb[0].mxu0 %v225
    %v296 = vpop.f32.mrb[0].mxu0
    %v297 = vadd.f32 %v223, %v296
    %v298 = vpop.f32.mrb[0].mxu0
    %299 = vmatprep.mubr.f32.mxu0 0.0
    %300 = vmatmul.mubr.f32.gmra.mrb[0].mxu0 %v228
    %v301 = vpop.f32.mrb[0].mxu0
    %v302 = vadd.f32 %v223, %v301
    %v303 = vpop.f32.mrb[0].mxu0
    %304 = vdwg.mxu0
    %307 = vrot.lane.b32.xlu0 %v297, 96
    %v308 = vpop.permute.xlu0 %307
    %309 = vrot.lane.b32.xlu0 %v302, 96
    %v310 = vpop.permute.xlu0 %309
    %vm311 = vcmask 130048
    %v312 = vsel %vm311, %v297, 0
    %v314 = vsel %vm311, %v302, 0
    %v316 = vsel %vm311, %v308, 0
    %v318 = vsel %vm311, %v310, 0
    %320 = vmatprep.subr.mxu0 0.0
    %321 = vmatpush1.xpose.msra.mxu0 %v316
    %322 = vmatprep.subr.mxu0 0.0
    %323 = vmatpush1.xpose.msra.mxu0 %v318
    %324 = vmatprep.subr.mxu0 0.0
    %325 = vmatpush1.xpose.msra.mxu0 0.0
    %326 = vmatprep.subr.mxu0 0.0
    %327 = vmatpush1.xpose.msra.mxu0 0.0
    %328 = vmatprep.subr.mxu0 0.0
    %329 = vmatpush1.xpose.msra.mxu0 0.0
    %330 = vmatprep.subr.mxu0 0.0
    %331 = vmatpush1.xpose.msra.mxu0 0.0
    %332 = vmatprep.subr.mxu0 0.0
    %333 = vmatpush1.xpose.msra.mxu0 0.0
    %334 = vmatprep.subr.mxu0 0.0
    %335 = vmatpush1.xpose.msra.mxu0 0.0
    %336 = vmatprep.subr.mxu0 0.0
    %337 = vmatpush1.xpose.msra.mxu0 0.0
    %338 = vmatprep.subr.mxu0 0.0
    %339 = vmatpush1.xpose.msra.mxu0 0.0
    %340 = vmatprep.subr.mxu0 0.0
    %341 = vmatpush1.xpose.msra.mxu0 0.0
    %342 = vmatprep.subr.mxu0 0.0
    %343 = vmatpush1.xpose.msra.mxu0 0.0
    %344 = vmatprep.subr.mxu0 0.0
    %345 = vmatpush1.xpose.msra.mxu0 0.0
    %346 = vmatprep.subr.mxu0 0.0
    %347 = vmatpush1.xpose.msra.mxu0 0.0
    %348 = vmatprep.subr.mxu0 0.0
    %349 = vmatpush1.xpose.msra.mxu0 0.0
    %350 = vmatprep.subr.mxu0 0.0
    %351 = vmatpush1.xpose.msra.mxu0 0.0
    %352 = vmatprep.subr.mxu0 0.0
    %353 = vmatpush1.xpose.msra.mxu0 0.0
    %354 = vmatprep.subr.mxu0 0.0
    %355 = vmatpush1.xpose.msra.mxu0 0.0
    %356 = vmatprep.subr.mxu0 0.0
    %357 = vmatpush1.xpose.msra.mxu0 0.0
    %358 = vmatprep.subr.mxu0 0.0
    %359 = vmatpush1.xpose.msra.mxu0 0.0
    %360 = vmatprep.subr.mxu0 0.0
    %361 = vmatpush1.xpose.msra.mxu0 0.0
    %362 = vmatprep.subr.mxu0 0.0
    %363 = vmatpush1.xpose.msra.mxu0 0.0
    %364 = vmatprep.subr.mxu0 0.0
    %365 = vmatpush1.xpose.msra.mxu0 0.0
    %366 = vmatprep.subr.mxu0 0.0
    %367 = vmatpush1.xpose.msra.mxu0 0.0
    %368 = vmatprep.subr.mxu0 0.0
    %369 = vmatpush1.xpose.msra.mxu0 0.0
    %370 = vmatprep.subr.mxu0 0.0
    %371 = vmatpush1.xpose.msra.mxu0 0.0
    %372 = vmatprep.subr.mxu0 0.0
    %373 = vmatpush1.xpose.msra.mxu0 0.0
    %374 = vmatprep.subr.mxu0 0.0
    %375 = vmatpush1.xpose.msra.mxu0 0.0
    %376 = vmatprep.subr.mxu0 0.0
    %377 = vmatpush1.xpose.msra.mxu0 0.0
    %378 = vmatprep.subr.mxu0 0.0
    %379 = vmatpush1.xpose.msra.mxu0 0.0
    %380 = vmatprep.subr.mxu0 0.0
    %381 = vmatpush1.xpose.msra.mxu0 0.0
    %382 = vmatprep.subr.mxu0 0.0
    %383 = vmatpush1.xpose.msra.mxu0 0.0
    %384 = vmatprep.mubr.f32.mxu0 0.0
    %385 = vmatmul.mubr.f32.gmra.mrb[0].mxu0 %v312
    %v386 = vpop.f32.mrb[0].mxu0
    %v387 = vadd.f32 0.0, %v386
    %v388 = vpop.f32.mrb[0].mxu0
    %389 = vmatprep.mubr.f32.mxu0 0.0
    %390 = vmatmul.mubr.f32.gmra.mrb[0].mxu0 %v314
    %v391 = vpop.f32.mrb[0].mxu0
    %v392 = vadd.f32 0.0, %v391
    %v393 = vpop.f32.mrb[0].mxu0
    %394 = vdwg.mxu0
    %v395 = vmul.f32 %v387, 0.25
    %v396 = vmul.f32 %v392, 0.25
    %v397 = vadd.f32 %v395, %v189
    %v398 = vadd.f32 %v396, %v190
    %v399 = vsel %vm311, %v397, -inf
    %400 = vmax.xlane.f32.xlu0 %v399
    %v401 = vpop.xlane.xlu0 %400
    %v402 = vsel %vm311, %v398, -inf
    %403 = vmax.xlane.f32.xlu0 %v402
    %v404 = vpop.xlane.xlu0 %403
    %v405 = vsub.f32 %v397, %v401
    %v406 = vsub.f32 %v398, %v404
    %v407 = vmul.f32 %v405, 1.442695
    %v408 = vpow.pop %v407
    %v409 = vmul.f32 %v406, 1.442695
    %v410 = vpow.pop %v409
    %v411 = vsel %vm311, %v408, 0.0
    %412 = vadd.xlane.f32.xlu0 %v411
    %v413 = vpop.xlane.xlu0 %412
    %v414 = vsel %vm311, %v410, 0.0
    %415 = vadd.xlane.f32.xlu0 %v414
    %v416 = vpop.xlane.xlu0 %415
    %v417 = vrcp.pop %v413
    %v418 = vrcp.pop %v416
    %v419 = vmul.f32 %v408, %v417
    %v420 = vmul.f32 %v410, %v418
    %421 = vrot.lane.b32.xlu0 %v297, 64
    %v422 = vpop.permute.xlu0 %421
    %423 = vrot.lane.b32.xlu0 %v302, 64
    %v424 = vpop.permute.xlu0 %423
    %v428 = vsel %vm311, %v419, 0
    %v431 = vsel %vm311, %v420, 0
    %433 = vmatprep.subr.mxu0 0.0
    %434 = vmatpush1.msra.mxu0 %v422
    %435 = vmatprep.subr.mxu0 0.0
    %436 = vmatpush1.msra.mxu0 %v424
    %437 = vmatprep.subr.mxu0 0.0
    %438 = vmatpush1.msra.mxu0 0.0
    %439 = vmatprep.subr.mxu0 0.0
    %440 = vmatpush1.msra.mxu0 0.0
    %441 = vmatprep.subr.mxu0 0.0
    %442 = vmatpush1.msra.mxu0 0.0
    %443 = vmatprep.subr.mxu0 0.0
    %444 = vmatpush1.msra.mxu0 0.0
    %445 = vmatprep.subr.mxu0 0.0
    %446 = vmatpush1.msra.mxu0 0.0
    %447 = vmatprep.subr.mxu0 0.0
    %448 = vmatpush1.msra.mxu0 0.0
    %449 = vmatprep.subr.mxu0 0.0
    %450 = vmatpush1.msra.mxu0 0.0
    %451 = vmatprep.subr.mxu0 0.0
    %452 = vmatpush1.msra.mxu0 0.0
    %453 = vmatprep.subr.mxu0 0.0
    %454 = vmatpush1.msra.mxu0 0.0
    %455 = vmatprep.subr.mxu0 0.0
    %456 = vmatpush1.msra.mxu0 0.0
    %457 = vmatprep.subr.mxu0 0.0
    %458 = vmatpush1.msra.mxu0 0.0
    %459 = vmatprep.subr.mxu0 0.0
    %460 = vmatpush1.msra.mxu0 0.0
    %461 = vmatprep.subr.mxu0 0.0
    %462 = vmatpush1.msra.mxu0 0.0
    %463 = vmatprep.subr.mxu0 0.0
    %464 = vmatpush1.msra.mxu0 0.0
    %465 = vmatprep.subr.mxu0 0.0
    %466 = vmatpush1.msra.mxu0 0.0
    %467 = vmatprep.subr.mxu0 0.0
    %468 = vmatpush1.msra.mxu0 0.0
    %469 = vmatprep.subr.mxu0 0.0
    %470 = vmatpush1.msra.mxu0 0.0
    %471 = vmatprep.subr.mxu0 0.0
    %472 = vmatpush1.msra.mxu0 0.0
    %473 = vmatprep.subr.mxu0 0.0
    %474 = vmatpush1.msra.mxu0 0.0
    %475 = vmatprep.subr.mxu0 0.0
    %476 = vmatpush1.msra.mxu0 0.0
    %477 = vmatprep.subr.mxu0 0.0
    %478 = vmatpush1.msra.mxu0 0.0
    %479 = vmatprep.subr.mxu0 0.0
    %480 = vmatpush1.msra.mxu0 0.0
    %481 = vmatprep.subr.mxu0 0.0
    %482 = vmatpush1.msra.mxu0 0.0
    %483 = vmatprep.subr.mxu0 0.0
    %484 = vmatpush1.msra.mxu0 0.0
    %485 = vmatprep.subr.mxu0 0.0
    %486 = vmatpush1.msra.mxu0 0.0
    %487 = vmatprep.subr.mxu0 0.0
    %488 = vmatpush1.msra.mxu0 0.0
    %489 = vmatprep.subr.mxu0 0.0
    %490 = vmatpush1.msra.mxu0 0.0
    %491 = vmatprep.subr.mxu0 0.0
    %492 = vmatpush1.msra.mxu0 0.0
    %493 = vmatprep.subr.mxu0 0.0
    %494 = vmatpush1.msra.mxu0 0.0
    %495 = vmatprep.subr.mxu0 0.0
    %496 = vmatpush1.msra.mxu0 0.0
    %497 = vmatprep.mubr.f32.mxu0 0.0
    %498 = vmatmul.mubr.f32.gmra.mrb[0].mxu0 %v428
    %v499 = vpop.f32.mrb[0].mxu0
    %v500 = vadd.f32 0.0, %v499
    %v501 = vpop.f32.mrb[0].mxu0
    %502 = vmatprep.mubr.f32.mxu0 0.0
    %503 = vmatmul.mubr.f32.gmra.mrb[0].mxu0 %v431
    %v504 = vpop.f32.mrb[0].mxu0
    %v505 = vadd.f32 0.0, %v504
    %v506 = vpop.f32.mrb[0].mxu0
    %507 = vdwg.mxu0
    %508 = vrot.lane.b32.xlu0 %v297, 112
    %v509 = vpop.permute.xlu0 %508
    %510 = vrot.lane.b32.xlu0 %v302, 112
    %v511 = vpop.permute.xlu0 %510
    %512 = vrot.lane.b32.xlu0 %v297, 80
    %v513 = vpop.permute.xlu0 %512
    %514 = vrot.lane.b32.xlu0 %v302, 80
    %v515 = vpop.permute.xlu0 %514
    %v516 = vsel %vm311, %v509, 0
    %v518 = vsel %vm311, %v511, 0
    %v520 = vsel %vm311, %v513, 0
    %v522 = vsel %vm311, %v515, 0
    %524 = vmatprep.subr.mxu0 0.0
    %525 = vmatpush1.xpose.msra.mxu0 %v520
    %526 = vmatprep.subr.mxu0 0.0
    %527 = vmatpush1.xpose.msra.mxu0 %v522
    %528 = vmatprep.subr.mxu0 0.0
    %529 = vmatpush1.xpose.msra.mxu0 0.0
    %530 = vmatprep.subr.mxu0 0.0
    %531 = vmatpush1.xpose.msra.mxu0 0.0
    %532 = vmatprep.subr.mxu0 0.0
    %533 = vmatpush1.xpose.msra.mxu0 0.0
    %534 = vmatprep.subr.mxu0 0.0
    %535 = vmatpush1.xpose.msra.mxu0 0.0
    %536 = vmatprep.subr.mxu0 0.0
    %537 = vmatpush1.xpose.msra.mxu0 0.0
    %538 = vmatprep.subr.mxu0 0.0
    %539 = vmatpush1.xpose.msra.mxu0 0.0
    %540 = vmatprep.subr.mxu0 0.0
    %541 = vmatpush1.xpose.msra.mxu0 0.0
    %542 = vmatprep.subr.mxu0 0.0
    %543 = vmatpush1.xpose.msra.mxu0 0.0
    %544 = vmatprep.subr.mxu0 0.0
    %545 = vmatpush1.xpose.msra.mxu0 0.0
    %546 = vmatprep.subr.mxu0 0.0
    %547 = vmatpush1.xpose.msra.mxu0 0.0
    %548 = vmatprep.subr.mxu0 0.0
    %549 = vmatpush1.xpose.msra.mxu0 0.0
    %550 = vmatprep.subr.mxu0 0.0
    %551 = vmatpush1.xpose.msra.mxu0 0.0
    %552 = vmatprep.subr.mxu0 0.0
    %553 = vmatpush1.xpose.msra.mxu0 0.0
    %554 = vmatprep.subr.mxu0 0.0
    %555 = vmatpush1.xpose.msra.mxu0 0.0
    %556 = vmatprep.subr.mxu0 0.0
    %557 = vmatpush1.xpose.msra.mxu0 0.0
    %558 = vmatprep.subr.mxu0 0.0
    %559 = vmatpush1.xpose.msra.mxu0 0.0
    %560 = vmatprep.subr.mxu0 0.0
    %561 = vmatpush1.xpose.msra.mxu0 0.0
    %562 = vmatprep.subr.mxu0 0.0
    %563 = vmatpush1.xpose.msra.mxu0 0.0
    %564 = vmatprep.subr.mxu0 0.0
    %565 = vmatpush1.xpose.msra.mxu0 0.0
    %566 = vmatprep.subr.mxu0 0.0
    %567 = vmatpush1.xpose.msra.mxu0 0.0
    %568 = vmatprep.subr.mxu0 0.0
    %569 = vmatpush1.xpose.msra.mxu0 0.0
    %570 = vmatprep.subr.mxu0 0.0
    %571 = vmatpush1.xpose.msra.mxu0 0.0
    %572 = vmatprep.subr.mxu0 0.0
    %573 = vmatpush1.xpose.msra.mxu0 0.0
    %574 = vmatprep.subr.mxu0 0.0
    %575 = vmatpush1.xpose.msra.mxu0 0.0
    %576 = vmatprep.subr.mxu0 0.0
    %577 = vmatpush1.xpose.msra.mxu0 0.0
    %578 = vmatprep.subr.mxu0 0.0
    %579 = vmatpush1.xpose.msra.mxu0 0.0
    %580 = vmatprep.subr.mxu0 0.0
    %581 = vmatpush1.xpose.msra.mxu0 0.0
    %582 = vmatprep.subr.mxu0 0.0
    %583 = vmatpush1.xpose.msra.mxu0 0.0
    %584 = vmatprep.subr.mxu0 0.0
    %585 = vmatpush1.xpose.msra.mxu0 0.0
    %586 = vmatprep.subr.mxu0 0.0
    %587 = vmatpush1.xpose.msra.mxu0 0.0
    %588 = vmatprep.mubr.f32.mxu0 0.0
    %589 = vmatmul.mubr.f32.gmra.mrb[0].mxu0 %v516
    %v590 = vpop.f32.mrb[0].mxu0
    %v591 = vadd.f32 0.0, %v590
    %v592 = vpop.f32.mrb[0].mxu0
    %593 = vmatprep.mubr.f32.mxu0 0.0
    %594 = vmatmul.mubr.f32.gmra.mrb[0].mxu0 %v518
    %v595 = vpop.f32.mrb[0].mxu0
    %v596 = vadd.f32 0.0, %v595
    %v597 = vpop.f32.mrb[0].mxu0
    %598 = vdwg.mxu0
    %v599 = vmul.f32 %v591, 0.25
    %v600 = vmul.f32 %v596, 0.25
    %v601 = vadd.f32 %v599, %v189
    %v602 = vadd.f32 %v600, %v190
    %v603 = vsel %vm311, %v601, -inf
    %604 = vmax.xlane.f32.xlu0 %v603
    %v605 = vpop.xlane.xlu0 %604
    %v606 = vsel %vm311, %v602, -inf
    %607 = vmax.xlane.f32.xlu0 %v606
    %v608 = vpop.xlane.xlu0 %607
    %v609 = vsub.f32 %v601, %v605
    %v610 = vsub.f32 %v602, %v608
    %v611 = vmul.f32 %v609, 1.442695
    %v612 = vpow.pop %v611
    %v613 = vmul.f32 %v610, 1.442695
    %v614 = vpow.pop %v613
    %v615 = vsel %vm311, %v612, 0.0
    %616 = vadd.xlane.f32.xlu0 %v615
    %v617 = vpop.xlane.xlu0 %616
    %v618 = vsel %vm311, %v614, 0.0
    %619 = vadd.xlane.f32.xlu0 %v618
    %v620 = vpop.xlane.xlu0 %619
    %v621 = vrcp.pop %v617
    %v622 = vrcp.pop %v620
    %v623 = vmul.f32 %v612, %v621
    %v624 = vmul.f32 %v614, %v622
    %625 = vrot.lane.b32.xlu0 %v297, 48
    %v626 = vpop.permute.xlu0 %625
    %627 = vrot.lane.b32.xlu0 %v302, 48
    %v628 = vpop.permute.xlu0 %627
    %v632 = vsel %vm311, %v623, 0
    %v635 = vsel %vm311, %v624, 0
    %637 = vmatprep.subr.mxu0 0.0
    %638 = vmatpush1.msra.mxu0 %v626
    %639 = vmatprep.subr.mxu0 0.0
    %640 = vmatpush1.msra.mxu0 %v628
    %641 = vmatprep.subr.mxu0 0.0
    %642 = vmatpush1.msra.mxu0 0.0
    %643 = vmatprep.subr.mxu0 0.0
    %644 = vmatpush1.msra.mxu0 0.0
    %645 = vmatprep.subr.mxu0 0.0
    %646 = vmatpush1.msra.mxu0 0.0
    %647 = vmatprep.subr.mxu0 0.0
    %648 = vmatpush1.msra.mxu0 0.0
    %649 = vmatprep.subr.mxu0 0.0
    %650 = vmatpush1.msra.mxu0 0.0
    %651 = vmatprep.subr.mxu0 0.0
    %652 = vmatpush1.msra.mxu0 0.0
    %653 = vmatprep.subr.mxu0 0.0
    %654 = vmatpush1.msra.mxu0 0.0
    %655 = vmatprep.subr.mxu0 0.0
    %656 = vmatpush1.msra.mxu0 0.0
    %657 = vmatprep.subr.mxu0 0.0
    %658 = vmatpush1.msra.mxu0 0.0
    %659 = vmatprep.subr.mxu0 0.0
    %660 = vmatpush1.msra.mxu0 0.0
    %661 = vmatprep.subr.mxu0 0.0
    %662 = vmatpush1.msra.mxu0 0.0
    %663 = vmatprep.subr.mxu0 0.0
    %664 = vmatpush1.msra.mxu0 0.0
    %665 = vmatprep.subr.mxu0 0.0
    %666 = vmatpush1.msra.mxu0 0.0
    %667 = vmatprep.subr.mxu0 0.0
    %668 = vmatpush1.msra.mxu0 0.0
    %669 = vmatprep.subr.mxu0 0.0
    %670 = vmatpush1.msra.mxu0 0.0
    %671 = vmatprep.subr.mxu0 0.0
    %672 = vmatpush1.msra.mxu0 0.0
    %673 = vmatprep.subr.mxu0 0.0
    %674 = vmatpush1.msra.mxu0 0.0
    %675 = vmatprep.subr.mxu0 0.0
    %676 = vmatpush1.msra.mxu0 0.0
    %677 = vmatprep.subr.mxu0 0.0
    %678 = vmatpush1.msra.mxu0 0.0
    %679 = vmatprep.subr.mxu0 0.0
    %680 = vmatpush1.msra.mxu0 0.0
    %681 = vmatprep.subr.mxu0 0.0
    %682 = vmatpush1.msra.mxu0 0.0
    %683 = vmatprep.subr.mxu0 0.0
    %684 = vmatpush1.msra.mxu0 0.0
    %685 = vmatprep.subr.mxu0 0.0
    %686 = vmatpush1.msra.mxu0 0.0
    %687 = vmatprep.subr.mxu0 0.0
    %688 = vmatpush1.msra.mxu0 0.0
    %689 = vmatprep.subr.mxu0 0.0
    %690 = vmatpush1.msra.mxu0 0.0
    %691 = vmatprep.subr.mxu0 0.0
    %692 = vmatpush1.msra.mxu0 0.0
    %693 = vmatprep.subr.mxu0 0.0
    %694 = vmatpush1.msra.mxu0 0.0
    %695 = vmatprep.subr.mxu0 0.0
    %696 = vmatpush1.msra.mxu0 0.0
    %697 = vmatprep.subr.mxu0 0.0
    %698 = vmatpush1.msra.mxu0 0.0
    %699 = vmatprep.subr.mxu0 0.0
    %700 = vmatpush1.msra.mxu0 0.0
    %701 = vmatprep.mubr.f32.mxu0 0.0
    %702 = vmatmul.mubr.f32.gmra.mrb[0].mxu0 %v632
    %v703 = vpop.f32.mrb[0].mxu0
    %v704 = vadd.f32 0.0, %v703
    %v705 = vpop.f32.mrb[0].mxu0
    %706 = vmatprep.mubr.f32.mxu0 0.0
    %707 = vmatmul.mubr.f32.gmra.mrb[0].mxu0 %v635
    %v708 = vpop.f32.mrb[0].mxu0
    %v709 = vadd.f32 0.0, %v708
    %v710 = vpop.f32.mrb[0].mxu0
    %711 = vdwg.mxu0
    %v713 = vsel %vm311, %v704, 0
    %v716 = vsel %vm311, %v709, 0
    %718 = vmatprep.subr.mxu0 0.0
    %719 = vmatpush1.msra.mxu0 %v197
    %720 = vmatprep.subr.mxu0 0.0
    %721 = vmatpush1.msra.mxu0 %v198
    %722 = vmatprep.subr.mxu0 0.0
    %723 = vmatpush1.msra.mxu0 0.0
    %724 = vmatprep.subr.mxu0 0.0
    %725 = vmatpush1.msra.mxu0 0.0
    %726 = vmatprep.subr.mxu0 0.0
    %727 = vmatpush1.msra.mxu0 0.0
    %728 = vmatprep.subr.mxu0 0.0
    %729 = vmatpush1.msra.mxu0 0.0
    %730 = vmatprep.subr.mxu0 0.0
    %731 = vmatpush1.msra.mxu0 0.0
    %732 = vmatprep.subr.mxu0 0.0
    %733 = vmatpush1.msra.mxu0 0.0
    %734 = vmatprep.subr.mxu0 0.0
    %735 = vmatpush1.msra.mxu0 0.0
    %736 = vmatprep.subr.mxu0 0.0
    %737 = vmatpush1.msra.mxu0 0.0
    %738 = vmatprep.subr.mxu0 0.0
    %739 = vmatpush1.msra.mxu0 0.0
    %740 = vmatprep.subr.mxu0 0.0
    %741 = vmatpush1.msra.mxu0 0.0
    %742 = vmatprep.subr.mxu0 0.0
    %743 = vmatpush1.msra.mxu0 0.0
    %744 = vmatprep.subr.mxu0 0.0
    %745 = vmatpush1.msra.mxu0 0.0
    %746 = vmatprep.subr.mxu0 0.0
    %747 = vmatpush1.msra.mxu0 0.0
    %748 = vmatprep.subr.mxu0 0.0
    %749 = vmatpush1.msra.mxu0 0.0
    %750 = vmatprep.subr.mxu0 0.0
    %751 = vmatpush1.msra.mxu0 0.0
    %752 = vmatprep.subr.mxu0 0.0
    %753 = vmatpush1.msra.mxu0 0.0
    %754 = vmatprep.subr.mxu0 0.0
    %755 = vmatpush1.msra.mxu0 0.0
    %756 = vmatprep.subr.mxu0 0.0
    %757 = vmatpush1.msra.mxu0 0.0
    %758 = vmatprep.subr.mxu0 0.0
    %759 = vmatpush1.msra.mxu0 0.0
    %760 = vmatprep.subr.mxu0 0.0
    %761 = vmatpush1.msra.mxu0 0.0
    %762 = vmatprep.subr.mxu0 0.0
    %763 = vmatpush1.msra.mxu0 0.0
    %764 = vmatprep.subr.mxu0 0.0
    %765 = vmatpush1.msra.mxu0 0.0
    %766 = vmatprep.subr.mxu0 0.0
    %767 = vmatpush1.msra.mxu0 0.0
    %768 = vmatprep.subr.mxu0 0.0
    %769 = vmatpush1.msra.mxu0 0.0
    %770 = vmatprep.subr.mxu0 0.0
    %771 = vmatpush1.msra.mxu0 0.0
    %772 = vmatprep.subr.mxu0 0.0
    %773 = vmatpush1.msra.mxu0 0.0
    %774 = vmatprep.subr.mxu0 0.0
    %775 = vmatpush1.msra.mxu0 0.0
    %776 = vmatprep.subr.mxu0 0.0
    %777 = vmatpush1.msra.mxu0 0.0
    %778 = vmatprep.subr.mxu0 0.0
    %779 = vmatpush1.msra.mxu0 0.0
    %780 = vmatprep.subr.mxu0 0.0
    %781 = vmatpush1.msra.mxu0 0.0
    %782 = vmatprep.mubr.f32.mxu0 0.0
    %783 = vmatmul.mubr.f32.gmra.mrb[0].mxu0 %v713
    %v784 = vpop.f32.mrb[0].mxu0
    %v785 = vadd.f32 0.0, %v784
    %v786 = vpop.f32.mrb[0].mxu0
    %787 = vmatprep.mubr.f32.mxu0 0.0
    %788 = vmatmul.mubr.f32.gmra.mrb[0].mxu0 %v716
    %v789 = vpop.f32.mrb[0].mxu0
    %v790 = vadd.f32 0.0, %v789
    %v791 = vpop.f32.mrb[0].mxu0
    %792 = vdwg.mxu0
    %v794 = vsel %vm311, %v500, 0
    %v797 = vsel %vm311, %v505, 0
    %799 = vmatprep.subr.mxu0 0.0
    %800 = vmatpush1.msra.mxu0 %v195
    %801 = vmatprep.subr.mxu0 0.0
    %802 = vmatpush1.msra.mxu0 %v196
    %803 = vmatprep.subr.mxu0 0.0
    %804 = vmatpush1.msra.mxu0 0.0
    %805 = vmatprep.subr.mxu0 0.0
    %806 = vmatpush1.msra.mxu0 0.0
    %807 = vmatprep.subr.mxu0 0.0
    %808 = vmatpush1.msra.mxu0 0.0
    %809 = vmatprep.subr.mxu0 0.0
    %810 = vmatpush1.msra.mxu0 0.0
    %811 = vmatprep.subr.mxu0 0.0
    %812 = vmatpush1.msra.mxu0 0.0
    %813 = vmatprep.subr.mxu0 0.0
    %814 = vmatpush1.msra.mxu0 0.0
    %815 = vmatprep.subr.mxu0 0.0
    %816 = vmatpush1.msra.mxu0 0.0
    %817 = vmatprep.subr.mxu0 0.0
    %818 = vmatpush1.msra.mxu0 0.0
    %819 = vmatprep.subr.mxu0 0.0
    %820 = vmatpush1.msra.mxu0 0.0
    %821 = vmatprep.subr.mxu0 0.0
    %822 = vmatpush1.msra.mxu0 0.0
    %823 = vmatprep.subr.mxu0 0.0
    %824 = vmatpush1.msra.mxu0 0.0
    %825 = vmatprep.subr.mxu0 0.0
    %826 = vmatpush1.msra.mxu0 0.0
    %827 = vmatprep.subr.mxu0 0.0
    %828 = vmatpush1.msra.mxu0 0.0
    %829 = vmatprep.subr.mxu0 0.0
    %830 = vmatpush1.msra.mxu0 0.0
    %831 = vmatprep.subr.mxu0 0.0
    %832 = vmatpush1.msra.mxu0 0.0
    %833 = vmatprep.subr.mxu0 0.0
    %834 = vmatpush1.msra.mxu0 0.0
    %835 = vmatprep.subr.mxu0 0.0
    %836 = vmatpush1.msra.mxu0 0.0
    %837 = vmatprep.subr.mxu0 0.0
    %838 = vmatpush1.msra.mxu0 0.0
    %839 = vmatprep.subr.mxu0 0.0
    %840 = vmatpush1.msra.mxu0 0.0
    %841 = vmatprep.subr.mxu0 0.0
    %842 = vmatpush1.msra.mxu0 0.0
    %843 = vmatprep.subr.mxu0 0.0
    %844 = vmatpush1.msra.mxu0 0.0
    %845 = vmatprep.subr.mxu0 0.0
    %846 = vmatpush1.msra.mxu0 0.0
    %847 = vmatprep.subr.mxu0 0.0
    %848 = vmatpush1.msra.mxu0 0.0
    %849 = vmatprep.subr.mxu0 0.0
    %850 = vmatpush1.msra.mxu0 0.0
    %851 = vmatprep.subr.mxu0 0.0
    %852 = vmatpush1.msra.mxu0 0.0
    %853 = vmatprep.subr.mxu0 0.0
    %854 = vmatpush1.msra.mxu0 0.0
    %855 = vmatprep.subr.mxu0 0.0
    %856 = vmatpush1.msra.mxu0 0.0
    %857 = vmatprep.subr.mxu0 0.0
    %858 = vmatpush1.msra.mxu0 0.0
    %859 = vmatprep.subr.mxu0 0.0
    %860 = vmatpush1.msra.mxu0 0.0
    %861 = vmatprep.subr.mxu0 0.0
    %862 = vmatpush1.msra.mxu0 0.0
    %863 = vmatprep.mubr.f32.mxu0 0.0
    %864 = vmatmul.mubr.f32.gmra.mrb[0].mxu0 %v794
    %v865 = vpop.f32.mrb[0].mxu0
    %v866 = vadd.f32 %v785, %v865
    %v867 = vpop.f32.mrb[0].mxu0
    %868 = vmatprep.mubr.f32.mxu0 0.0
    %869 = vmatmul.mubr.f32.gmra.mrb[0].mxu0 %v797
    %v870 = vpop.f32.mrb[0].mxu0
    %v871 = vadd.f32 %v790, %v870
    %v872 = vpop.f32.mrb[0].mxu0
    %873 = vdwg.mxu0
    %v874 = vlaneseq
    %v875 = vshrl.u32 %v874, 7
    %v876 = vsub.s32 1, %v875
    %v877 = vrot.slane %v219, %v876
    %v878 = vadd.f32 %v866, %v877
    %v879 = vadd.f32 %v871, %v877
    %v880 = vadd.f32 %v176, %v878
    %v881 = vadd.f32 %v177, %v879
    %v882 = vsel %vm138, %v880, 0.0
    %883 = vadd.xlane.f32.xlu0 %v882
    %v884 = vpop.xlane.xlu0 %883
    %v885 = vsel %vm138, %v881, 0.0
    %886 = vadd.xlane.f32.xlu0 %v885
    %v887 = vpop.xlane.xlu0 %886
    %v888 = vmul.f32 %v884, %v145
    %v889 = vmul.f32 %v887, %v145
    %v890 = vsub.f32 %v880, %v888
    %v891 = vsub.f32 %v881, %v889
    %v892 = vmul.f32 %v890, %v890
    %v893 = vmul.f32 %v891, %v891
    %v894 = vsel %vm138, %v892, 0.0
    %895 = vadd.xlane.f32.xlu0 %v894
    %v896 = vpop.xlane.xlu0 %895
    %v897 = vsel %vm138, %v893, 0.0
    %898 = vadd.xlane.f32.xlu0 %v897
    %v899 = vpop.xlane.xlu0 %898
    %v900 = vmul.f32 %v896, %v145
    %v901 = vmul.f32 %v899, %v145
    %v902 = vadd.f32 %v900, 1e-12
    %v903 = vadd.f32 %v901, 1e-12
    %v904 = vrsqrt.pop %v902
    %v905 = vrsqrt.pop %v903
    %v906 = vmul.f32 %v890, %v904
    %v907 = vmul.f32 %v891, %v905
    %v908 = vlaneseq
    %v909 = vshrl.u32 %v908, 7
    %v910 = vsub.s32 2, %v909
    %v911 = vrot.slane %v219, %v910
    %v912 = vmul.f32 %v906, %v911
    %v913 = vmul.f32 %v907, %v911
    %v914 = vlaneseq
    %v915 = vshrl.u32 %v914, 7
    %v916 = vsub.s32 3, %v915
    %v917 = vrot.slane %v219, %v916
    %v918 = vadd.f32 %v912, %v917
    %v919 = vadd.f32 %v913, %v917
    %v920 = vlaneseq
    %v921 = vshrl.u32 %v920, 7
    %v922 = vsub.s32 4, %v921
    %v923 = vrot.slane %v219, %v922
    %v925 = vsel %vm138, %v918, 0
    %v928 = vsel %vm138, %v919, 0
    %930 = vmatprep.subr.mxu0 0.0
    %931 = vmatpush1.msra.mxu0 %v199
    %932 = vmatprep.subr.mxu0 0.0
    %933 = vmatpush1.msra.mxu0 %v200
    %934 = vmatprep.subr.mxu0 0.0
    %935 = vmatpush1.msra.mxu0 %v201
    %936 = vmatprep.subr.mxu0 0.0
    %937 = vmatpush1.msra.mxu0 %v202
    %938 = vmatprep.subr.mxu0 0.0
    %939 = vmatpush1.msra.mxu0 0.0
    %940 = vmatprep.subr.mxu0 0.0
    %941 = vmatpush1.msra.mxu0 0.0
    %942 = vmatprep.subr.mxu0 0.0
    %943 = vmatpush1.msra.mxu0 0.0
    %944 = vmatprep.subr.mxu0 0.0
    %945 = vmatpush1.msra.mxu0 0.0
    %946 = vmatprep.subr.mxu0 0.0
    %947 = vmatpush1.msra.mxu0 0.0
    %948 = vmatprep.subr.mxu0 0.0
    %949 = vmatpush1.msra.mxu0 0.0
    %950 = vmatprep.subr.mxu0 0.0
    %951 = vmatpush1.msra.mxu0 0.0
    %952 = vmatprep.subr.mxu0 0.0
    %953 = vmatpush1.msra.mxu0 0.0
    %954 = vmatprep.subr.mxu0 0.0
    %955 = vmatpush1.msra.mxu0 0.0
    %956 = vmatprep.subr.mxu0 0.0
    %957 = vmatpush1.msra.mxu0 0.0
    %958 = vmatprep.subr.mxu0 0.0
    %959 = vmatpush1.msra.mxu0 0.0
    %960 = vmatprep.subr.mxu0 0.0
    %961 = vmatpush1.msra.mxu0 0.0
    %962 = vmatprep.subr.mxu0 0.0
    %963 = vmatpush1.msra.mxu0 0.0
    %964 = vmatprep.subr.mxu0 0.0
    %965 = vmatpush1.msra.mxu0 0.0
    %966 = vmatprep.subr.mxu0 0.0
    %967 = vmatpush1.msra.mxu0 0.0
    %968 = vmatprep.subr.mxu0 0.0
    %969 = vmatpush1.msra.mxu0 0.0
    %970 = vmatprep.subr.mxu0 0.0
    %971 = vmatpush1.msra.mxu0 0.0
    %972 = vmatprep.subr.mxu0 0.0
    %973 = vmatpush1.msra.mxu0 0.0
    %974 = vmatprep.subr.mxu0 0.0
    %975 = vmatpush1.msra.mxu0 0.0
    %976 = vmatprep.subr.mxu0 0.0
    %977 = vmatpush1.msra.mxu0 0.0
    %978 = vmatprep.subr.mxu0 0.0
    %979 = vmatpush1.msra.mxu0 0.0
    %980 = vmatprep.subr.mxu0 0.0
    %981 = vmatpush1.msra.mxu0 0.0
    %982 = vmatprep.subr.mxu0 0.0
    %983 = vmatpush1.msra.mxu0 0.0
    %984 = vmatprep.subr.mxu0 0.0
    %985 = vmatpush1.msra.mxu0 0.0
    %986 = vmatprep.subr.mxu0 0.0
    %987 = vmatpush1.msra.mxu0 0.0
    %988 = vmatprep.subr.mxu0 0.0
    %989 = vmatpush1.msra.mxu0 0.0
    %990 = vmatprep.subr.mxu0 0.0
    %991 = vmatpush1.msra.mxu0 0.0
    %992 = vmatprep.subr.mxu0 0.0
    %993 = vmatpush1.msra.mxu0 0.0
    %994 = vmatprep.mubr.f32.mxu0 0.0
    %995 = vmatmul.mubr.f32.gmra.mrb[0].mxu0 %v925
    %v996 = vpop.f32.mrb[0].mxu0
    %v997 = vadd.f32 %v923, %v996
    %v998 = vpop.f32.mrb[0].mxu0
    %999 = vmatprep.mubr.f32.mxu0 0.0
    %1000 = vmatmul.mubr.f32.gmra.mrb[0].mxu0 %v928
    %v1001 = vpop.f32.mrb[0].mxu0
    %v1002 = vadd.f32 %v923, %v1001
    %v1003 = vpop.f32.mrb[0].mxu0
    %1004 = vdwg.mxu0
    %v1005 = vmul.f32 %v997, %v997
    %v1006 = vmul.f32 %v1002, %v1002
    %v1007 = vmul.f32 %v997, %v1005
    %v1008 = vmul.f32 %v1002, %v1006
    %v1009 = vmul.f32 %v1007, 0.044715
    %v1010 = vmul.f32 %v1008, 0.044715
    %v1011 = vadd.f32 %v997, %v1009
    %v1012 = vadd.f32 %v1002, %v1010
    %v1013 = vmul.f32 %v1011, 0.7978846
    %v1014 = vmul.f32 %v1012, 0.7978846
    %v1015 = vtanh.pop %v1013
    %v1016 = vtanh.pop %v1014
    %v1017 = vadd.f32 %v1015, 1.0
    %v1018 = vadd.f32 %v1016, 1.0
    %v1019 = vmul.f32 %v1017, 0.5
    %v1020 = vmul.f32 %v1018, 0.5
    %v1021 = vmul.f32 %v997, %v1019
    %v1022 = vmul.f32 %v1002, %v1020
    %v1023 = vlaneseq
    %v1024 = vshrl.u32 %v1023, 7
    %v1025 = vsub.s32 5, %v1024
    %v1026 = vrot.slane %v219, %v1025
    %1027 = vmatprep.subr.mxu0 0.0
    %1028 = vmatpush1.msra.mxu0 %v203
    %1029 = vmatprep.subr.mxu0 0.0
    %1030 = vmatpush1.msra.mxu0 %v204
    %1031 = vmatprep.subr.mxu0 0.0
    %1032 = vmatpush1.msra.mxu0 %v205
    %1033 = vmatprep.subr.mxu0 0.0
    %1034 = vmatpush1.msra.mxu0 %v206
    %1035 = vmatprep.subr.mxu0 0.0
    %1036 = vmatpush1.msra.mxu0 %v207
    %1037 = vmatprep.subr.mxu0 0.0
    %1038 = vmatpush1.msra.mxu0 %v208
    %1039 = vmatprep.subr.mxu0 0.0
    %1040 = vmatpush1.msra.mxu0 %v209
    %1041 = vmatprep.subr.mxu0 0.0
    %1042 = vmatpush1.msra.mxu0 %v210
    %1043 = vmatprep.subr.mxu0 0.0
    %1044 = vmatpush1.msra.mxu0 %v211
    %1045 = vmatprep.subr.mxu0 0.0
    %1046 = vmatpush1.msra.mxu0 %v212
    %1047 = vmatprep.subr.mxu0 0.0
    %1048 = vmatpush1.msra.mxu0 %v213
    %1049 = vmatprep.subr.mxu0 0.0
    %1050 = vmatpush1.msra.mxu0 %v214
    %1051 = vmatprep.subr.mxu0 0.0
    %1052 = vmatpush1.msra.mxu0 %v215
    %1053 = vmatprep.subr.mxu0 0.0
    %1054 = vmatpush1.msra.mxu0 %v216
    %1055 = vmatprep.subr.mxu0 0.0
    %1056 = vmatpush1.msra.mxu0 %v217
    %1057 = vmatprep.subr.mxu0 0.0
    %1058 = vmatpush1.msra.mxu0 %v218
    %1059 = vmatprep.subr.mxu0 0.0
    %1060 = vmatpush1.msra.mxu0 0.0
    %1061 = vmatprep.subr.mxu0 0.0
    %1062 = vmatpush1.msra.mxu0 0.0
    %1063 = vmatprep.subr.mxu0 0.0
    %1064 = vmatpush1.msra.mxu0 0.0
    %1065 = vmatprep.subr.mxu0 0.0
    %1066 = vmatpush1.msra.mxu0 0.0
    %1067 = vmatprep.subr.mxu0 0.0
    %1068 = vmatpush1.msra.mxu0 0.0
    %1069 = vmatprep.subr.mxu0 0.0
    %1070 = vmatpush1.msra.mxu0 0.0
    %1071 = vmatprep.subr.mxu0 0.0
    %1072 = vmatpush1.msra.mxu0 0.0
    %1073 = vmatprep.subr.mxu0 0.0
    %1074 = vmatpush1.msra.mxu0 0.0
    %1075 = vmatprep.subr.mxu0 0.0
    %1076 = vmatpush1.msra.mxu0 0.0
    %1077 = vmatprep.subr.mxu0 0.0
    %1078 = vmatpush1.msra.mxu0 0.0
    %1079 = vmatprep.subr.mxu0 0.0
    %1080 = vmatpush1.msra.mxu0 0.0
    %1081 = vmatprep.subr.mxu0 0.0
    %1082 = vmatpush1.msra.mxu0 0.0
    %1083 = vmatprep.subr.mxu0 0.0
    %1084 = vmatpush1.msra.mxu0 0.0
    %1085 = vmatprep.subr.mxu0 0.0
    %1086 = vmatpush1.msra.mxu0 0.0
    %1087 = vmatprep.subr.mxu0 0.0
    %1088 = vmatpush1.msra.mxu0 0.0
    %1089 = vmatprep.subr.mxu0 0.0
    %1090 = vmatpush1.msra.mxu0 0.0
    %1091 = vmatprep.mubr.f32.mxu0 0.0
    %1092 = vmatmul.mubr.f32.gmra.mrb[0].mxu0 %v1021
    %v1093 = vpop.f32.mrb[0].mxu0
    %v1094 = vadd.f32 %v1026, %v1093
    %v1095 = vpop.f32.mrb[0].mxu0
    %1096 = vmatprep.mubr.f32.mxu0 0.0
    %1097 = vmatmul.mubr.f32.gmra.mrb[0].mxu0 %v1022
    %v1098 = vpop.f32.mrb[0].mxu0
    %v1099 = vadd.f32 %v1026, %v1098
    %v1100 = vpop.f32.mrb[0].mxu0
    %1101 = vdwg.mxu0
    %v1102 = vadd.f32 %v918, %v1094
    %v1103 = vadd.f32 %v919, %v1099
    %v1104 = vsel %vm138, %v1102, 0.0
    %1105 = vadd.xlane.f32.xlu0 %v1104
    %v1106 = vpop.xlane.xlu0 %1105
    %v1107 = vsel %vm138, %v1103, 0.0
    %1108 = vadd.xlane.f32.xlu0 %v1107
    %v1109 = vpop.xlane.xlu0 %1108
    %v1110 = vmul.f32 %v1106, %v145
    %v1111 = vmul.f32 %v1109, %v145
    %v1112 = vsub.f32 %v1102, %v1110
    %v1113 = vsub.f32 %v1103, %v1111
    %v1114 = vmul.f32 %v1112, %v1112
    %v1115 = vmul.f32 %v1113, %v1113
    %v1116 = vsel %vm138, %v1114, 0.0
    %1117 = vadd.xlane.f32.xlu0 %v1116
    %v1118 = vpop.xlane.xlu0 %1117
    %v1119 = vsel %vm138, %v1115, 0.0
    %1120 = vadd.xlane.f32.xlu0 %v1119
    %v1121 = vpop.xlane.xlu0 %1120
    %v1122 = vmul.f32 %v1118, %v145
    %v1123 = vmul.f32 %v1121, %v145
    %v1124 = vadd.f32 %v1122, 1e-12
    %v1125 = vadd.f32 %v1123, 1e-12
    %v1126 = vrsqrt.pop %v1124
    %v1127 = vrsqrt.pop %v1125
    %v1128 = vmul.f32 %v1112, %v1126
    %v1129 = vmul.f32 %v1113, %v1127
    %v1130 = vlaneseq
    %v1131 = vshrl.u32 %v1130, 7
    %v1132 = vsub.s32 6, %v1131
    %v1133 = vrot.slane %v219, %v1132
    %v1134 = vmul.f32 %v1128, %v1133
    %v1135 = vmul.f32 %v1129, %v1133
    %v1136 = vlaneseq
    %v1137 = vshrl.u32 %v1136, 7
    %v1138 = vsub.s32 7, %v1137
    %v1139 = vrot.slane %v219, %v1138
    %v1140 = vadd.f32 %v1134, %v1139
    %v1141 = vadd.f32 %v1135, %v1139
    %v1142 = vld [vmem:[#allocation2 + $0x150] sm:$0xff]
    %v1143 = vld [vmem:[#allocation2 + $0x158] sm:$0xff]
    %v1144 = vld [vmem:[#allocation2 + $0x160] sm:$0xff]
    %v1145 = vld [vmem:[#allocation2 + $0x168] sm:$0xff]
    %v1146 = vld [vmem:[#allocation2 + $0x170] sm:$0xff]
    %v1147 = vld [vmem:[#allocation2 + $0x178] sm:$0xff]
    %v1148 = vld [vmem:[#allocation2 + $0x180] sm:$0xff]
    %v1149 = vld [vmem:[#allocation2 + $0x188] sm:$0xff]
    %v1150 = vld [vmem:[#allocation2 + $0x190] sm:$0xff]
    %v1151 = vld [vmem:[#allocation2 + $0x198] sm:$0xff]
    %v1152 = vld [vmem:[#allocation2 + $0x1a0] sm:$0xff]
    %v1153 = vld [vmem:[#allocation2 + $0x1a8] sm:$0xff]
    %v1154 = vld [vmem:[#allocation2 + $0x1b0] sm:$0xff]
    %v1155 = vld [vmem:[#allocation2 + $0x1b8] sm:$0xff]
    %v1156 = vld [vmem:[#allocation2 + $0x1c0] sm:$0xff]
    %v1157 = vld [vmem:[#allocation2 + $0x1c8] sm:$0xff]
    %v1158 = vld [vmem:[#allocation2 + $0x1d0] sm:$0xff]
    %v1159 = vld [vmem:[#allocation2 + $0x1d8] sm:$0xff]
    %v1160 = vld [vmem:[#allocation2 + $0x1e0] sm:$0xff]
    %v1161 = vld [vmem:[#allocation2 + $0x1e8] sm:$0xff]
    %v1162 = vld [vmem:[#allocation2 + $0x1f0] sm:$0xff]
    %v1163 = vld [vmem:[#allocation2 + $0x1f8] sm:$0xff]
    %v1164 = vld [vmem:[#allocation2 + $0x200] sm:$0xff]
    %v1165 = vld [vmem:[#allocation2 + $0x208] sm:$0xff]
    %v1166 = vld [vmem:[#allocation2 + $0x210] sm:$0xff]
    %v1167 = vld [vmem:[#allocation2 + $0x218] sm:$0xff]
    %v1168 = vld [vmem:[#allocation2 + $0x220] sm:$0xff]
    %v1169 = vld [vmem:[#allocation2 + $0x228] sm:$0xff]
    %v1170 = vld [vmem:[#allocation2 + $0x230] sm:$0xff]
    %v1171 = vlaneseq
    %v1172 = vshrl.u32 %v1171, 7
    %v1173 = vsub.s32 0, %v1172
    %v1174 = vrot.slane %v1170, %v1173
    %v1176 = vsel %vm138, %v1140, 0
    %v1179 = vsel %vm138, %v1141, 0
    %1181 = vmatprep.subr.mxu0 0.0
    %1182 = vmatpush1.msra.mxu0 %v1142
    %1183 = vmatprep.subr.mxu0 0.0
    %1184 = vmatpush1.msra.mxu0 %v1143
    %1185 = vmatprep.subr.mxu0 0.0
    %1186 = vmatpush1.msra.mxu0 %v1144
    %1187 = vmatprep.subr.mxu0 0.0
    %1188 = vmatpush1.msra.mxu0 %v1145
    %1189 = vmatprep.subr.mxu0 0.0
    %1190 = vmatpush1.msra.mxu0 0.0
    %1191 = vmatprep.subr.mxu0 0.0
    %1192 = vmatpush1.msra.mxu0 0.0
    %1193 = vmatprep.subr.mxu0 0.0
    %1194 = vmatpush1.msra.mxu0 0.0
    %1195 = vmatprep.subr.mxu0 0.0
    %1196 = vmatpush1.msra.mxu0 0.0
    %1197 = vmatprep.subr.mxu0 0.0
    %1198 = vmatpush1.msra.mxu0 0.0
    %1199 = vmatprep.subr.mxu0 0.0
    %1200 = vmatpush1.msra.mxu0 0.0
    %1201 = vmatprep.subr.mxu0 0.0
    %1202 = vmatpush1.msra.mxu0 0.0
    %1203 = vmatprep.subr.mxu0 0.0
    %1204 = vmatpush1.msra.mxu0 0.0
    %1205 = vmatprep.subr.mxu0 0.0
    %1206 = vmatpush1.msra.mxu0 0.0
    %1207 = vmatprep.subr.mxu0 0.0
    %1208 = vmatpush1.msra.mxu0 0.0
    %1209 = vmatprep.subr.mxu0 0.0
    %1210 = vmatpush1.msra.mxu0 0.0
    %1211 = vmatprep.subr.mxu0 0.0
    %1212 = vmatpush1.msra.mxu0 0.0
    %1213 = vmatprep.subr.mxu0 0.0
    %1214 = vmatpush1.msra.mxu0 0.0
    %1215 = vmatprep.subr.mxu0 0.0
    %1216 = vmatpush1.msra.mxu0 0.0
    %1217 = vmatprep.subr.mxu0 0.0
    %1218 = vmatpush1.msra.mxu0 0.0
    %1219 = vmatprep.subr.mxu0 0.0
    %1220 = vmatpush1.msra.mxu0 0.0
    %1221 = vmatprep.subr.mxu0 0.0
    %1222 = vmatpush1.msra.mxu0 0.0
    %1223 = vmatprep.subr.mxu0 0.0
    %1224 = vmatpush1.msra.mxu0 0.0
    %1225 = vmatprep.subr.mxu0 0.0
    %1226 = vmatpush1.msra.mxu0 0.0
    %1227 = vmatprep.subr.mxu0 0.0
    %1228 = vmatpush1.msra.mxu0 0.0
    %1229 = vmatprep.subr.mxu0 0.0
    %1230 = vmatpush1.msra.mxu0 0.0
    %1231 = vmatprep.subr.mxu0 0.0
    %1232 = vmatpush1.msra.mxu0 0.0
    %1233 = vmatprep.subr.mxu0 0.0
    %1234 = vmatpush1.msra.mxu0 0.0
    %1235 = vmatprep.subr.mxu0 0.0
    %1236 = vmatpush1.msra.mxu0 0.0
    %1237 = vmatprep.subr.mxu0 0.0
    %1238 = vmatpush1.msra.mxu0 0.0
    %1239 = vmatprep.subr.mxu0 0.0
    %1240 = vmatpush1.msra.mxu0 0.0
    %1241 = vmatprep.subr.mxu0 0.0
    %1242 = vmatpush1.msra.mxu0 0.0
    %1243 = vmatprep.subr.mxu0 0.0
    %1244 = vmatpush1.msra.mxu0 0.0
    %1245 = vmatprep.mubr.f32.mxu0 0.0
    %1246 = vmatmul.mubr.f32.gmra.mrb[0].mxu0 %v1176
    %v1247 = vpop.f32.mrb[0].mxu0
    %v1248 = vadd.f32 %v1174, %v1247
    %v1249 = vpop.f32.mrb[0].mxu0
    %1250 = vmatprep.mubr.f32.mxu0 0.0
    %1251 = vmatmul.mubr.f32.gmra.mrb[0].mxu0 %v1179
    %v1252 = vpop.f32.mrb[0].mxu0
    %v1253 = vadd.f32 %v1174, %v1252
    %v1254 = vpop.f32.mrb[0].mxu0
    %1255 = vdwg.mxu0
    %1258 = vrot.lane.b32.xlu0 %v1248, 96
    %v1259 = vpop.permute.xlu0 %1258
    %1260 = vrot.lane.b32.xlu0 %v1253, 96
    %v1261 = vpop.permute.xlu0 %1260
    %v1262 = vsel %vm311, %v1248, 0
    %v1264 = vsel %vm311, %v1253, 0
    %v1266 = vsel %vm311, %v1259, 0
    %v1268 = vsel %vm311, %v1261, 0
    %1270 = vmatprep.subr.mxu0 0.0
    %1271 = vmatpush1.xpose.msra.mxu0 %v1266
    %1272 = vmatprep.subr.mxu0 0.0
    %1273 = vmatpush1.xpose.msra.mxu0 %v1268
    %1274 = vmatprep.subr.mxu0 0.0
    %1275 = vmatpush1.xpose.msra.mxu0 0.0
    %1276 = vmatprep.subr.mxu0 0.0
    %1277 = vmatpush1.xpose.msra.mxu0 0.0
    %1278 = vmatprep.subr.mxu0 0.0
    %1279 = vmatpush1.xpose.msra.mxu0 0.0
    %1280 = vmatprep.subr.mxu0 0.0
    %1281 = vmatpush1.xpose.msra.mxu0 0.0
    %1282 = vmatprep.subr.mxu0 0.0
    %1283 = vmatpush1.xpose.msra.mxu0 0.0
    %1284 = vmatprep.subr.mxu0 0.0
    %1285 = vmatpush1.xpose.msra.mxu0 0.0
    %1286 = vmatprep.subr.mxu0 0.0
    %1287 = vmatpush1.xpose.msra.mxu0 0.0
    %1288 = vmatprep.subr.mxu0 0.0
    %1289 = vmatpush1.xpose.msra.mxu0 0.0
    %1290 = vmatprep.subr.mxu0 0.0
    %1291 = vmatpush1.xpose.msra.mxu0 0.0
    %1292 = vmatprep.subr.mxu0 0.0
    %1293 = vmatpush1.xpose.msra.mxu0 0.0
    %1294 = vmatprep.subr.mxu0 0.0
    %1295 = vmatpush1.xpose.msra.mxu0 0.0
    %1296 = vmatprep.subr.mxu0 0.0
    %1297 = vmatpush1.xpose.msra.mxu0 0.0
    %1298 = vmatprep.subr.mxu0 0.0
    %1299 = vmatpush1.xpose.msra.mxu0 0.0
    %1300 = vmatprep.subr.mxu0 0.0
    %1301 = vmatpush1.xpose.msra.mxu0 0.0
    %1302 = vmatprep.subr.mxu0 0.0
    %1303 = vmatpush1.xpose.msra.mxu0 0.0
    %1304 = vmatprep.subr.mxu0 0.0
    %1305 = vmatpush1.xpose.msra.mxu0 0.0
    %1306 = vmatprep.subr.mxu0 0.0
    %1307 = vmatpush1.xpose.msra.mxu0 0.0
    %1308 = vmatprep.subr.mxu0 0.0
    %1309 = vmatpush1.xpose.msra.mxu0 0.0
    %1310 = vmatprep.subr.mxu0 0.0
    %1311 = vmatpush1.xpose.msra.mxu0 0.0
    %1312 = vmatprep.subr.mxu0 0.0
    %1313 = vmatpush1.xpose.msra.mxu0 0.0
    %1314 = vmatprep.subr.mxu0 0.0
    %1315 = vmatpush1.xpose.msra.mxu0 0.0
    %1316 = vmatprep.subr.mxu0 0.0
    %1317 = vmatpush1.xpose.msra.mxu0 0.0
    %1318 = vmatprep.subr.mxu0 0.0
    %1319 = vmatpush1.xpose.msra.mxu0 0.0
    %1320 = vmatprep.subr.mxu0 0.0
    %1321 = vmatpush1.xpose.msra.mxu0 0.0
    %1322 = vmatprep.subr.mxu0 0.0
    %1323 = vmatpush1.xpose.msra.mxu0 0.0
    %1324 = vmatprep.subr.mxu0 0.0
    %1325 = vmatpush1.xpose.msra.mxu0 0.0
    %1326 = vmatprep.subr.mxu0 0.0
    %1327 = vmatpush1.xpose.msra.mxu0 0.0
    %1328 = vmatprep.subr.mxu0 0.0
    %1329 = vmatpush1.xpose.msra.mxu0 0.0
    %1330 = vmatprep.subr.mxu0 0.0
    %1331 = vmatpush1.xpose.msra.mxu0 0.0
    %1332 = vmatprep.subr.mxu0 0.0
    %1333 = vmatpush1.xpose.msra.mxu0 0.0
    %1334 = vmatprep.mubr.f32.mxu0 0.0
    %1335 = vmatmul.mubr.f32.gmra.mrb[0].mxu0 %v1262
    %v1336 = vpop.f32.mrb[0].mxu0
    %v1337 = vadd.f32 0.0, %v1336
    %v1338 = vpop.f32.mrb[0].mxu0
    %1339 = vmatprep.mubr.f32.mxu0 0.0
    %1340 = vmatmul.mubr.f32.gmra.mrb[0].mxu0 %v1264
    %v1341 = vpop.f32.mrb[0].mxu0
    %v1342 = vadd.f32 0.0, %v1341
    %v1343 = vpop.f32.mrb[0].mxu0
    %1344 = vdwg.mxu0
    %v1345 = vmul.f32 %v1337, 0.25
    %v1346 = vmul.f32 %v1342, 0.25
    %v1347 = vadd.f32 %v1345, %v189
    %v1348 = vadd.f32 %v1346, %v190
    %v1349 = vsel %vm311, %v1347, -inf
    %1350 = vmax.xlane.f32.xlu0 %v1349
    %v1351 = vpop.xlane.xlu0 %1350
    %v1352 = vsel %vm311, %v1348, -inf
    %1353 = vmax.xlane.f32.xlu0 %v1352
    %v1354 = vpop.xlane.xlu0 %1353
    %v1355 = vsub.f32 %v1347, %v1351
    %v1356 = vsub.f32 %v1348, %v1354
    %v1357 = vmul.f32 %v1355, 1.442695
    %v1358 = vpow.pop %v1357
    %v1359 = vmul.f32 %v1356, 1.442695
    %v1360 = vpow.pop %v1359
    %v1361 = vsel %vm311, %v1358, 0.0
    %1362 = vadd.xlane.f32.xlu0 %v1361
    %v1363 = vpop.xlane.xlu0 %1362
    %v1364 = vsel %vm311, %v1360, 0.0
    %1365 = vadd.xlane.f32.xlu0 %v1364
    %v1366 = vpop.xlane.xlu0 %1365
    %v1367 = vrcp.pop %v1363
    %v1368 = vrcp.pop %v1366
    %v1369 = vmul.f32 %v1358, %v1367
    %v1370 = vmul.f32 %v1360, %v1368
    %1371 = vrot.lane.b32.xlu0 %v1248, 64
    %v1372 = vpop.permute.xlu0 %1371
    %1373 = vrot.lane.b32.xlu0 %v1253, 64
    %v1374 = vpop.permute.xlu0 %1373
    %v1378 = vsel %vm311, %v1369, 0
    %v1381 = vsel %vm311, %v1370, 0
    %1383 = vmatprep.subr.mxu0 0.0
    %1384 = vmatpush1.msra.mxu0 %v1372
    %1385 = vmatprep.subr.mxu0 0.0
    %1386 = vmatpush1.msra.mxu0 %v1374
    %1387 = vmatprep.subr.mxu0 0.0
    %1388 = vmatpush1.msra.mxu0 0.0
    %1389 = vmatprep.subr.mxu0 0.0
    %1390 = vmatpush1.msra.mxu0 0.0
    %1391 = vmatprep.subr.mxu0 0.0
    %1392 = vmatpush1.msra.mxu0 0.0
    %1393 = vmatprep.subr.mxu0 0.0
    %1394 = vmatpush1.msra.mxu0 0.0
    %1395 = vmatprep.subr.mxu0 0.0
    %1396 = vmatpush1.msra.mxu0 0.0
    %1397 = vmatprep.subr.mxu0 0.0
    %1398 = vmatpush1.msra.mxu0 0.0
    %1399 = vmatprep.subr.mxu0 0.0
    %1400 = vmatpush1.msra.mxu0 0.0
    %1401 = vmatprep.subr.mxu0 0.0
    %1402 = vmatpush1.msra.mxu0 0.0
    %1403 = vmatprep.subr.mxu0 0.0
    %1404 = vmatpush1.msra.mxu0 0.0
    %1405 = vmatprep.subr.mxu0 0.0
    %1406 = vmatpush1.msra.mxu0 0.0
    %1407 = vmatprep.subr.mxu0 0.0
    %1408 = vmatpush1.msra.mxu0 0.0
    %1409 = vmatprep.subr.mxu0 0.0
    %1410 = vmatpush1.msra.mxu0 0.0
    %1411 = vmatprep.subr.mxu0 0.0
    %1412 = vmatpush1.msra.mxu0 0.0
    %1413 = vmatprep.subr.mxu0 0.0
    %1414 = vmatpush1.msra.mxu0 0.0
    %1415 = vmatprep.subr.mxu0 0.0
    %1416 = vmatpush1.msra.mxu0 0.0
    %1417 = vmatprep.subr.mxu0 0.0
    %1418 = vmatpush1.msra.mxu0 0.0
    %1419 = vmatprep.subr.mxu0 0.0
    %1420 = vmatpush1.msra.mxu0 0.0
    %1421 = vmatprep.subr.mxu0 0.0
    %1422 = vmatpush1.msra.mxu0 0.0
    %1423 = vmatprep.subr.mxu0 0.0
    %1424 = vmatpush1.msra.mxu0 0.0
    %1425 = vmatprep.subr.mxu0 0.0
    %1426 = vmatpush1.msra.mxu0 0.0
    %1427 = vmatprep.subr.mxu0 0.0
    %1428 = vmatpush1.msra.mxu0 0.0
    %1429 = vmatprep.subr.mxu0 0.0
    %1430 = vmatpush1.msra.mxu0 0.0
    %1431 = vmatprep.subr.mxu0 0.0
    %1432 = vmatpush1.msra.mxu0 0.0
    %1433 = vmatprep.subr.mxu0 0.0
    %1434 = vmatpush1.msra.mxu0 0.0
    %1435 = vmatprep.subr.mxu0 0.0
    %1436 = vmatpush1.msra.mxu0 0.0
    %1437 = vmatprep.subr.mxu0 0.0
    %1438 = vmatpush1.msra.mxu0 0.0
    %1439 = vmatprep.subr.mxu0 0.0
    %1440 = vmatpush1.msra.mxu0 0.0
    %1441 = vmatprep.subr.mxu0 0.0
    %1442 = vmatpush1.msra.mxu0 0.0
    %1443 = vmatprep.subr.mxu0 0.0
    %1444 = vmatpush1.msra.mxu0 0.0
    %1445 = vmatprep.subr.mxu0 0.0
    %1446 = vmatpush1.msra.mxu0 0.0
    %1447 = vmatprep.mubr.f32.mxu0 0.0
    %1448 = vmatmul.mubr.f32.gmra.mrb[0].mxu0 %v1378
    %v1449 = vpop.f32.mrb[0].mxu0
    %v1450 = vadd.f32 0.0, %v1449
    %v1451 = vpop.f32.mrb[0].mxu0
    %1452 = vmatprep.mubr.f32.mxu0 0.0
    %1453 = vmatmul.mubr.f32.gmra.mrb[0].mxu0 %v1381
    %v1454 = vpop.f32.mrb[0].mxu0
    %v1455 = vadd.f32 0.0, %v1454
    %v1456 = vpop.f32.mrb[0].mxu0
    %1457 = vdwg.mxu0
    %1458 = vrot.lane.b32.xlu0 %v1248, 112
    %v1459 = vpop.permute.xlu0 %1458
    %1460 = vrot.lane.b32.xlu0 %v1253, 112
    %v1461 = vpop.permute.xlu0 %1460
    %1462 = vrot.lane.b32.xlu0 %v1248, 80
    %v1463 = vpop.permute.xlu0 %1462
    %1464 = vrot.lane.b32.xlu0 %v1253, 80
    %v1465 = vpop.permute.xlu0 %1464
    %v1466 = vsel %vm311, %v1459, 0
    %v1468 = vsel %vm311, %v1461, 0
    %v1470 = vsel %vm311, %v1463, 0
    %v1472 = vsel %vm311, %v1465, 0
    %1474 = vmatprep.subr.mxu0 0.0
    %1475 = vmatpush1.xpose.msra.mxu0 %v1470
    %1476 = vmatprep.subr.mxu0 0.0
    %1477 = vmatpush1.xpose.msra.mxu0 %v1472
    %1478 = vmatprep.subr.mxu0 0.0
    %1479 = vmatpush1.xpose.msra.mxu0 0.0
    %1480 = vmatprep.subr.mxu0 0.0
    %1481 = vmatpush1.xpose.msra.mxu0 0.0
    %1482 = vmatprep.subr.mxu0 0.0
    %1483 = vmatpush1.xpose.msra.mxu0 0.0
    %1484 = vmatprep.subr.mxu0 0.0
    %1485 = vmatpush1.xpose.msra.mxu0 0.0
    %1486 = vmatprep.subr.mxu0 0.0
    %1487 = vmatpush1.xpose.msra.mxu0 0.0
    %1488 = vmatprep.subr.mxu0 0.0
    %1489 = vmatpush1.xpose.msra.mxu0 0.0
    %1490 = vmatprep.subr.mxu0 0.0
    %1491 = vmatpush1.xpose.msra.mxu0 0.0
    %1492 = vmatprep.subr.mxu0 0.0
    %1493 = vmatpush1.xpose.msra.mxu0 0.0
    %1494 = vmatprep.subr.mxu0 0.0
    %1495 = vmatpush1.xpose.msra.mxu0 0.0
    %1496 = vmatprep.subr.mxu0 0.0
    %1497 = vmatpush1.xpose.msra.mxu0 0.0
    %1498 = vmatprep.subr.mxu0 0.0
    %1499 = vmatpush1.xpose.msra.mxu0 0.0
    %1500 = vmatprep.subr.mxu0 0.0
    %1501 = vmatpush1.xpose.msra.mxu0 0.0
    %1502 = vmatprep.subr.mxu0 0.0
    %1503 = vmatpush1.xpose.msra.mxu0 0.0
    %1504 = vmatprep.subr.mxu0 0.0
    %1505 = vmatpush1.xpose.msra.mxu0 0.0
    %1506 = vmatprep.subr.mxu0 0.0
    %1507 = vmatpush1.xpose.msra.mxu0 0.0
    %1508 = vmatprep.subr.mxu0 0.0
    %1509 = vmatpush1.xpose.msra.mxu0 0.0
    %1510 = vmatprep.subr.mxu0 0.0
    %1511 = vmatpush1.xpose.msra.mxu0 0.0
    %1512 = vmatprep.subr.mxu0 0.0
    %1513 = vmatpush1.xpose.msra.mxu0 0.0
    %1514 = vmatprep.subr.mxu0 0.0
    %1515 = vmatpush1.xpose.msra.mxu0 0.0
    %1516 = vmatprep.subr.mxu0 0.0
    %1517 = vmatpush1.xpose.msra.mxu0 0.0
    %1518 = vmatprep.subr.mxu0 0.0
    %1519 = vmatpush1.xpose.msra.mxu0 0.0
    %1520 = vmatprep.subr.mxu0 0.0
    %1521 = vmatpush1.xpose.msra.mxu0 0.0
    %1522 = vmatprep.subr.mxu0 0.0
    %1523 = vmatpush1.xpose.msra.mxu0 0.0
    %1524 = vmatprep.subr.mxu0 0.0
    %1525 = vmatpush1.xpose.msra.mxu0 0.0
    %1526 = vmatprep.subr.mxu0 0.0
    %1527 = vmatpush1.xpose.msra.mxu0 0.0
    %1528 = vmatprep.subr.mxu0 0.0
    %1529 = vmatpush1.xpose.msra.mxu0 0.0
    %1530 = vmatprep.subr.mxu0 0.0
    %1531 = vmatpush1.xpose.msra.mxu0 0.0
    %1532 = vmatprep.subr.mxu0 0.0
    %1533 = vmatpush1.xpose.msra.mxu0 0.0
    %1534 = vmatprep.subr.mxu0 0.0
    %1535 = vmatpush1.xpose.msra.mxu0 0.0
    %1536 = vmatprep.subr.mxu0 0.0
    %1537 = vmatpush1.xpose.msra.mxu0 0.0
    %1538 = vmatprep.mubr.f32.mxu0 0.0
    %1539 = vmatmul.mubr.f32.gmra.mrb[0].mxu0 %v1466
    %v1540 = vpop.f32.mrb[0].mxu0
    %v1541 = vadd.f32 0.0, %v1540
    %v1542 = vpop.f32.mrb[0].mxu0
    %1543 = vmatprep.mubr.f32.mxu0 0.0
    %1544 = vmatmul.mubr.f32.gmra.mrb[0].mxu0 %v1468
    %v1545 = vpop.f32.mrb[0].mxu0
    %v1546 = vadd.f32 0.0, %v1545
    %v1547 = vpop.f32.mrb[0].mxu0
    %1548 = vdwg.mxu0
    %v1549 = vmul.f32 %v1541, 0.25
    %v1550 = vmul.f32 %v1546, 0.25
    %v1551 = vadd.f32 %v1549, %v189
    %v1552 = vadd.f32 %v1550, %v190
    %v1553 = vsel %vm311, %v1551, -inf
    %1554 = vmax.xlane.f32.xlu0 %v1553
    %v1555 = vpop.xlane.xlu0 %1554
    %v1556 = vsel %vm311, %v1552, -inf
    %1557 = vmax.xlane.f32.xlu0 %v1556
    %v1558 = vpop.xlane.xlu0 %1557
    %v1559 = vsub.f32 %v1551, %v1555
    %v1560 = vsub.f32 %v1552, %v1558
    %v1561 = vmul.f32 %v1559, 1.442695
    %v1562 = vpow.pop %v1561
    %v1563 = vmul.f32 %v1560, 1.442695
    %v1564 = vpow.pop %v1563
    %v1565 = vsel %vm311, %v1562, 0.0
    %1566 = vadd.xlane.f32.xlu0 %v1565
    %v1567 = vpop.xlane.xlu0 %1566
    %v1568 = vsel %vm311, %v1564, 0.0
    %1569 = vadd.xlane.f32.xlu0 %v1568
    %v1570 = vpop.xlane.xlu0 %1569
    %v1571 = vrcp.pop %v1567
    %v1572 = vrcp.pop %v1570
    %v1573 = vmul.f32 %v1562, %v1571
    %v1574 = vmul.f32 %v1564, %v1572
    %1575 = vrot.lane.b32.xlu0 %v1248, 48
    %v1576 = vpop.permute.xlu0 %1575
    %1577 = vrot.lane.b32.xlu0 %v1253, 48
    %v1578 = vpop.permute.xlu0 %1577
    %v1582 = vsel %vm311, %v1573, 0
    %v1585 = vsel %vm311, %v1574, 0
    %1587 = vmatprep.subr.mxu0 0.0
    %1588 = vmatpush1.msra.mxu0 %v1576
    %1589 = vmatprep.subr.mxu0 0.0
    %1590 = vmatpush1.msra.mxu0 %v1578
    %1591 = vmatprep.subr.mxu0 0.0
    %1592 = vmatpush1.msra.mxu0 0.0
    %1593 = vmatprep.subr.mxu0 0.0
    %1594 = vmatpush1.msra.mxu0 0.0
    %1595 = vmatprep.subr.mxu0 0.0
    %1596 = vmatpush1.msra.mxu0 0.0
    %1597 = vmatprep.subr.mxu0 0.0
    %1598 = vmatpush1.msra.mxu0 0.0
    %1599 = vmatprep.subr.mxu0 0.0
    %1600 = vmatpush1.msra.mxu0 0.0
    %1601 = vmatprep.subr.mxu0 0.0
    %1602 = vmatpush1.msra.mxu0 0.0
    %1603 = vmatprep.subr.mxu0 0.0
    %1604 = vmatpush1.msra.mxu0 0.0
    %1605 = vmatprep.subr.mxu0 0.0
    %1606 = vmatpush1.msra.mxu0 0.0
    %1607 = vmatprep.subr.mxu0 0.0
    %1608 = vmatpush1.msra.mxu0 0.0
    %1609 = vmatprep.subr.mxu0 0.0
    %1610 = vmatpush1.msra.mxu0 0.0
    %1611 = vmatprep.subr.mxu0 0.0
    %1612 = vmatpush1.msra.mxu0 0.0
    %1613 = vmatprep.subr.mxu0 0.0
    %1614 = vmatpush1.msra.mxu0 0.0
    %1615 = vmatprep.subr.mxu0 0.0
    %1616 = vmatpush1.msra.mxu0 0.0
    %1617 = vmatprep.subr.mxu0 0.0
    %1618 = vmatpush1.msra.mxu0 0.0
    %1619 = vmatprep.subr.mxu0 0.0
    %1620 = vmatpush1.msra.mxu0 0.0
    %1621 = vmatprep.subr.mxu0 0.0
    %1622 = vmatpush1.msra.mxu0 0.0
    %1623 = vmatprep.subr.mxu0 0.0
    %1624 = vmatpush1.msra.mxu0 0.0
    %1625 = vmatprep.subr.mxu0 0.0
    %1626 = vmatpush1.msra.mxu0 0.0
    %1627 = vmatprep.subr.mxu0 0.0
    %1628 = vmatpush1.msra.mxu0 0.0
    %1629 = vmatprep.subr.mxu0 0.0
    %1630 = vmatpush1.msra.mxu0 0.0
    %1631 = vmatprep.subr.mxu0 0.0
    %1632 = vmatpush1.msra.mxu0 0.0
    %1633 = vmatprep.subr.mxu0 0.0
    %1634 = vmatpush1.msra.mxu0 0.0
    %1635 = vmatprep.subr.mxu0 0.0
    %1636 = vmatpush1.msra.mxu0 0.0
    %1637 = vmatprep.subr.mxu0 0.0
    %1638 = vmatpush1.msra.mxu0 0.0
    %1639 = vmatprep.subr.mxu0 0.0
    %1640 = vmatpush1.msra.mxu0 0.0
    %1641 = vmatprep.subr.mxu0 0.0
    %1642 = vmatpush1.msra.mxu0 0.0
    %1643 = vmatprep.subr.mxu0 0.0
    %1644 = vmatpush1.msra.mxu0 0.0
    %1645 = vmatprep.subr.mxu0 0.0
    %1646 = vmatpush1.msra.mxu0 0.0
    %1647 = vmatprep.subr.mxu0 0.0
    %1648 = vmatpush1.msra.mxu0 0.0
    %1649 = vmatprep.subr.mxu0 0.0
    %1650 = vmatpush1.msra.mxu0 0.0
    %1651 = vmatprep.mubr.f32.mxu0 0.0
    %1652 = vmatmul.mubr.f32.gmra.mrb[0].mxu0 %v1582
    %v1653 = vpop.f32.mrb[0].mxu0
    %v1654 = vadd.f32 0.0, %v1653
    %v1655 = vpop.f32.mrb[0].mxu0
    %1656 = vmatprep.mubr.f32.mxu0 0.0
    %1657 = vmatmul.mubr.f32.gmra.mrb[0].mxu0 %v1585
    %v1658 = vpop.f32.mrb[0].mxu0
    %v1659 = vadd.f32 0.0, %v1658
    %v1660 = vpop.f32.mrb[0].mxu0
    %1661 = vdwg.mxu0
    %v1663 = vsel %vm311, %v1654, 0
    %v1666 = vsel %vm311, %v1659, 0
    %1668 = vmatprep.subr.mxu0 0.0
    %1669 = vmatpush1.msra.mxu0 %v1148
    %1670 = vmatprep.subr.mxu0 0.0
    %1671 = vmatpush1.msra.mxu0 %v1149
    %1672 = vmatprep.subr.mxu0 0.0
    %1673 = vmatpush1.msra.mxu0 0.0
    %1674 = vmatprep.subr.mxu0 0.0
    %1675 = vmatpush1.msra.mxu0 0.0
    %1676 = vmatprep.subr.mxu0 0.0
    %1677 = vmatpush1.msra.mxu0 0.0
    %1678 = vmatprep.subr.mxu0 0.0
    %1679 = vmatpush1.msra.mxu0 0.0
    %1680 = vmatprep.subr.mxu0 0.0
    %1681 = vmatpush1.msra.mxu0 0.0
    %1682 = vmatprep.subr.mxu0 0.0
    %1683 = vmatpush1.msra.mxu0 0.0
    %1684 = vmatprep.subr.mxu0 0.0
    %1685 = vmatpush1.msra.mxu0 0.0
    %1686 = vmatprep.subr.mxu0 0.0
    %1687 = vmatpush1.msra.mxu0 0.0
    %1688 = vmatprep.subr.mxu0 0.0
    %1689 = vmatpush1.msra.mxu0 0.0
    %1690 = vmatprep.subr.mxu0 0.0
    %1691 = vmatpush1.msra.mxu0 0.0
    %1692 = vmatprep.subr.mxu0 0.0
    %1693 = vmatpush1.msra.mxu0 0.0
    %1694 = vmatprep.subr.mxu0 0.0
    %1695 = vmatpush1.msra.mxu0 0.0
    %1696 = vmatprep.subr.mxu0 0.0
    %1697 = vmatpush1.msra.mxu0 0.0
    %1698 = vmatprep.subr.mxu0 0.0
    %1699 = vmatpush1.msra.mxu0 0.0
    %1700 = vmatprep.subr.mxu0 0.0
    %1701 = vmatpush1.msra.mxu0 0.0
    %1702 = vmatprep.subr.mxu0 0.0
    %1703 = vmatpush1.msra.mxu0 0.0
    %1704 = vmatprep.subr.mxu0 0.0
    %1705 = vmatpush1.msra.mxu0 0.0
    %1706 = vmatprep.subr.mxu0 0.0
    %1707 = vmatpush1.msra.mxu0 0.0
    %1708 = vmatprep.subr.mxu0 0.0
    %1709 = vmatpush1.msra.mxu0 0.0
    %1710 = vmatprep.subr.mxu0 0.0
    %1711 = vmatpush1.msra.mxu0 0.0
    %1712 = vmatprep.subr.mxu0 0.0
    %1713 = vmatpush1.msra.mxu0 0.0
    %1714 = vmatprep.subr.mxu0 0.0
    %1715 = vmatpush1.msra.mxu0 0.0
    %1716 = vmatprep.subr.mxu0 0.0
    %1717 = vmatpush1.msra.mxu0 0.0
    %1718 = vmatprep.subr.mxu0 0.0
    %1719 = vmatpush1.msra.mxu0 0.0
    %1720 = vmatprep.subr.mxu0 0.0
    %1721 = vmatpush1.msra.mxu0 0.0
    %1722 = vmatprep.subr.mxu0 0.0
    %1723 = vmatpush1.msra.mxu0 0.0
    %1724 = vmatprep.subr.mxu0 0.0
    %1725 = vmatpush1.msra.mxu0 0.0
    %1726 = vmatprep.subr.mxu0 0.0
    %1727 = vmatpush1.msra.mxu0 0.0
    %1728 = vmatprep.subr.mxu0 0.0
    %1729 = vmatpush1.msra.mxu0 0.0
    %1730 = vmatprep.subr.mxu0 0.0
    %1731 = vmatpush1.msra.mxu0 0.0
    %1732 = vmatprep.mubr.f32.mxu0 0.0
    %1733 = vmatmul.mubr.f32.gmra.mrb[0].mxu0 %v1663
    %v1734 = vpop.f32.mrb[0].mxu0
    %v1735 = vadd.f32 0.0, %v1734
    %v1736 = vpop.f32.mrb[0].mxu0
    %1737 = vmatprep.mubr.f32.mxu0 0.0
    %1738 = vmatmul.mubr.f32.gmra.mrb[0].mxu0 %v1666
    %v1739 = vpop.f32.mrb[0].mxu0
    %v1740 = vadd.f32 0.0, %v1739
    %v1741 = vpop.f32.mrb[0].mxu0
    %1742 = vdwg.mxu0
    %v1744 = vsel %vm311, %v1450, 0
    %v1747 = vsel %vm311, %v1455, 0
    %1749 = vmatprep.subr.mxu0 0.0
    %1750 = vmatpush1.msra.mxu0 %v1146
    %1751 = vmatprep.subr.mxu0 0.0
    %1752 = vmatpush1.msra.mxu0 %v1147
    %1753 = vmatprep.subr.mxu0 0.0
    %1754 = vmatpush1.msra.mxu0 0.0
    %1755 = vmatprep.subr.mxu0 0.0
    %1756 = vmatpush1.msra.mxu0 0.0
    %1757 = vmatprep.subr.mxu0 0.0
    %1758 = vmatpush1.msra.mxu0 0.0
    %1759 = vmatprep.subr.mxu0 0.0
    %1760 = vmatpush1.msra.mxu0 0.0
    %1761 = vmatprep.subr.mxu0 0.0
    %1762 = vmatpush1.msra.mxu0 0.0
    %1763 = vmatprep.subr.mxu0 0.0
    %1764 = vmatpush1.msra.mxu0 0.0
    %1765 = vmatprep.subr.mxu0 0.0
    %1766 = vmatpush1.msra.mxu0 0.0
    %1767 = vmatprep.subr.mxu0 0.0
    %1768 = vmatpush1.msra.mxu0 0.0
    %1769 = vmatprep.subr.mxu0 0.0
    %1770 = vmatpush1.msra.mxu0 0.0
    %1771 = vmatprep.subr.mxu0 0.0
    %1772 = vmatpush1.msra.mxu0 0.0
    %1773 = vmatprep.subr.mxu0 0.0
    %1774 = vmatpush1.msra.mxu0 0.0
    %1775 = vmatprep.subr.mxu0 0.0
    %1776 = vmatpush1.msra.mxu0 0.0
    %1777 = vmatprep.subr.mxu0 0.0
    %1778 = vmatpush1.msra.mxu0 0.0
    %1779 = vmatprep.subr.mxu0 0.0
    %1780 = vmatpush1.msra.mxu0 0.0
    %1781 = vmatprep.subr.mxu0 0.0
    %1782 = vmatpush1.msra.mxu0 0.0
    %1783 = vmatprep.subr.mxu0 0.0
    %1784 = vmatpush1.msra.mxu0 0.0
    %1785 = vmatprep.subr.mxu0 0.0
    %1786 = vmatpush1.msra.mxu0 0.0
    %1787 = vmatprep.subr.mxu0 0.0
    %1788 = vmatpush1.msra.mxu0 0.0
    %1789 = vmatprep.subr.mxu0 0.0
    %1790 = vmatpush1.msra.mxu0 0.0
    %1791 = vmatprep.subr.mxu0 0.0
    %1792 = vmatpush1.msra.mxu0 0.0
    %1793 = vmatprep.subr.mxu0 0.0
    %1794 = vmatpush1.msra.mxu0 0.0
    %1795 = vmatprep.subr.mxu0 0.0
    %1796 = vmatpush1.msra.mxu0 0.0
    %1797 = vmatprep.subr.mxu0 0.0
    %1798 = vmatpush1.msra.mxu0 0.0
    %1799 = vmatprep.subr.mxu0 0.0
    %1800 = vmatpush1.msra.mxu0 0.0
    %1801 = vmatprep.subr.mxu0 0.0
    %1802 = vmatpush1.msra.mxu0 0.0
    %1803 = vmatprep.subr.mxu0 0.0
    %1804 = vmatpush1.msra.mxu0 0.0
    %1805 = vmatprep.subr.mxu0 0.0
    %1806 = vmatpush1.msra.mxu0 0.0
    %1807 = vmatprep.subr.mxu0 0.0
    %1808 = vmatpush1.msra.mxu0 0.0
    %1809 = vmatprep.subr.mxu0 0.0
    %1810 = vmatpush1.msra.mxu0 0.0
    %1811 = vmatprep.subr.mxu0 0.0
    %1812 = vmatpush1.msra.mxu0 0.0
    %1813 = vmatprep.mubr.f32.mxu0 0.0
    %1814 = vmatmul.mubr.f32.gmra.mrb[0].mxu0 %v1744
    %v1815 = vpop.f32.mrb[0].mxu0
    %v1816 = vadd.f32 %v1735, %v1815
    %v1817 = vpop.f32.mrb[0].mxu0
    %1818 = vmatprep.mubr.f32.mxu0 0.0
    %1819 = vmatmul.mubr.f32.gmra.mrb[0].mxu0 %v1747
    %v1820 = vpop.f32.mrb[0].mxu0
    %v1821 = vadd.f32 %v1740, %v1820
    %v1822 = vpop.f32.mrb[0].mxu0
    %1823 = vdwg.mxu0
    %v1824 = vlaneseq
    %v1825 = vshrl.u32 %v1824, 7
    %v1826 = vsub.s32 1, %v1825
    %v1827 = vrot.slane %v1170, %v1826
    %v1828 = vadd.f32 %v1816, %v1827
    %v1829 = vadd.f32 %v1821, %v1827
    %v1830 = vadd.f32 %v1140, %v1828
    %v1831 = vadd.f32 %v1141, %v1829
    %v1832 = vsel %vm138, %v1830, 0.0
    %1833 = vadd.xlane.f32.xlu0 %v1832
    %v1834 = vpop.xlane.xlu0 %1833
    %v1835 = vsel %vm138, %v1831, 0.0
    %1836 = vadd.xlane.f32.xlu0 %v1835
    %v1837 = vpop.xlane.xlu0 %1836
    %v1838 = vmul.f32 %v1834, %v145
    %v1839 = vmul.f32 %v1837, %v145
    %v1840 = vsub.f32 %v1830, %v1838
    %v1841 = vsub.f32 %v1831, %v1839
    %v1842 = vmul.f32 %v1840, %v1840
    %v1843 = vmul.f32 %v1841, %v1841
    %v1844 = vsel %vm138, %v1842, 0.0
    %1845 = vadd.xlane.f32.xlu0 %v1844
    %v1846 = vpop.xlane.xlu0 %1845
    %v1847 = vsel %vm138, %v1843, 0.0
    %1848 = vadd.xlane.f32.xlu0 %v1847
    %v1849 = vpop.xlane.xlu0 %1848
    %v1850 = vmul.f32 %v1846, %v145
    %v1851 = vmul.f32 %v1849, %v145
    %v1852 = vadd.f32 %v1850, 1e-12
    %v1853 = vadd.f32 %v1851, 1e-12
    %v1854 = vrsqrt.pop %v1852
    %v1855 = vrsqrt.pop %v1853
    %v1856 = vmul.f32 %v1840, %v1854
    %v1857 = vmul.f32 %v1841, %v1855
    %v1858 = vlaneseq
    %v1859 = vshrl.u32 %v1858, 7
    %v1860 = vsub.s32 2, %v1859
    %v1861 = vrot.slane %v1170, %v1860
    %v1862 = vmul.f32 %v1856, %v1861
    %v1863 = vmul.f32 %v1857, %v1861
    %v1864 = vlaneseq
    %v1865 = vshrl.u32 %v1864, 7
    %v1866 = vsub.s32 3, %v1865
    %v1867 = vrot.slane %v1170, %v1866
    %v1868 = vadd.f32 %v1862, %v1867
    %v1869 = vadd.f32 %v1863, %v1867
    %v1870 = vlaneseq
    %v1871 = vshrl.u32 %v1870, 7
    %v1872 = vsub.s32 4, %v1871
    %v1873 = vrot.slane %v1170, %v1872
    %v1875 = vsel %vm138, %v1868, 0
    %v1878 = vsel %vm138, %v1869, 0
    %1880 = vmatprep.subr.mxu0 0.0
    %1881 = vmatpush1.msra.mxu0 %v1150
    %1882 = vmatprep.subr.mxu0 0.0
    %1883 = vmatpush1.msra.mxu0 %v1151
    %1884 = vmatprep.subr.mxu0 0.0
    %1885 = vmatpush1.msra.mxu0 %v1152
    %1886 = vmatprep.subr.mxu0 0.0
    %1887 = vmatpush1.msra.mxu0 %v1153
    %1888 = vmatprep.subr.mxu0 0.0
    %1889 = vmatpush1.msra.mxu0 0.0
    %1890 = vmatprep.subr.mxu0 0.0
    %1891 = vmatpush1.msra.mxu0 0.0
    %1892 = vmatprep.subr.mxu0 0.0
    %1893 = vmatpush1.msra.mxu0 0.0
    %1894 = vmatprep.subr.mxu0 0.0
    %1895 = vmatpush1.msra.mxu0 0.0
    %1896 = vmatprep.subr.mxu0 0.0
    %1897 = vmatpush1.msra.mxu0 0.0
    %1898 = vmatprep.subr.mxu0 0.0
    %1899 = vmatpush1.msra.mxu0 0.0
    %1900 = vmatprep.subr.mxu0 0.0
    %1901 = vmatpush1.msra.mxu0 0.0
    %1902 = vmatprep.subr.mxu0 0.0
    %1903 = vmatpush1.msra.mxu0 0.0
    %1904 = vmatprep.subr.mxu0 0.0
    %1905 = vmatpush1.msra.mxu0 0.0
    %1906 = vmatprep.subr.mxu0 0.0
    %1907 = vmatpush1.msra.mxu0 0.0
    %1908 = vmatprep.subr.mxu0 0.0
    %1909 = vmatpush1.msra.mxu0 0.0
    %1910 = vmatprep.subr.mxu0 0.0
    %1911 = vmatpush1.msra.mxu0 0.0
    %1912 = vmatprep.subr.mxu0 0.0
    %1913 = vmatpush1.msra.mxu0 0.0
    %1914 = vmatprep.subr.mxu0 0.0
    %1915 = vmatpush1.msra.mxu0 0.0
    %1916 = vmatprep.subr.mxu0 0.0
    %1917 = vmatpush1.msra.mxu0 0.0
    %1918 = vmatprep.subr.mxu0 0.0
    %1919 = vmatpush1.msra.mxu0 0.0
    %1920 = vmatprep.subr.mxu0 0.0
    %1921 = vmatpush1.msra.mxu0 0.0
    %1922 = vmatprep.subr.mxu0 0.0
    %1923 = vmatpush1.msra.mxu0 0.0
    %1924 = vmatprep.subr.mxu0 0.0
    %1925 = vmatpush1.msra.mxu0 0.0
    %1926 = vmatprep.subr.mxu0 0.0
    %1927 = vmatpush1.msra.mxu0 0.0
    %1928 = vmatprep.subr.mxu0 0.0
    %1929 = vmatpush1.msra.mxu0 0.0
    %1930 = vmatprep.subr.mxu0 0.0
    %1931 = vmatpush1.msra.mxu0 0.0
    %1932 = vmatprep.subr.mxu0 0.0
    %1933 = vmatpush1.msra.mxu0 0.0
    %1934 = vmatprep.subr.mxu0 0.0
    %1935 = vmatpush1.msra.mxu0 0.0
    %1936 = vmatprep.subr.mxu0 0.0
    %1937 = vmatpush1.msra.mxu0 0.0
    %1938 = vmatprep.subr.mxu0 0.0
    %1939 = vmatpush1.msra.mxu0 0.0
    %1940 = vmatprep.subr.mxu0 0.0
    %1941 = vmatpush1.msra.mxu0 0.0
    %1942 = vmatprep.subr.mxu0 0.0
    %1943 = vmatpush1.msra.mxu0 0.0
    %1944 = vmatprep.mubr.f32.mxu0 0.0
    %1945 = vmatmul.mubr.f32.gmra.mrb[0].mxu0 %v1875
    %v1946 = vpop.f32.mrb[0].mxu0
    %v1947 = vadd.f32 %v1873, %v1946
    %v1948 = vpop.f32.mrb[0].mxu0
    %1949 = vmatprep.mubr.f32.mxu0 0.0
    %1950 = vmatmul.mubr.f32.gmra.mrb[0].mxu0 %v1878
    %v1951 = vpop.f32.mrb[0].mxu0
    %v1952 = vadd.f32 %v1873, %v1951
    %v1953 = vpop.f32.mrb[0].mxu0
    %1954 = vdwg.mxu0
    %v1955 = vmul.f32 %v1947, %v1947
    %v1956 = vmul.f32 %v1952, %v1952
    %v1957 = vmul.f32 %v1947, %v1955
    %v1958 = vmul.f32 %v1952, %v1956
    %v1959 = vmul.f32 %v1957, 0.044715
    %v1960 = vmul.f32 %v1958, 0.044715
    %v1961 = vadd.f32 %v1947, %v1959
    %v1962 = vadd.f32 %v1952, %v1960
    %v1963 = vmul.f32 %v1961, 0.7978846
    %v1964 = vmul.f32 %v1962, 0.7978846
    %v1965 = vtanh.pop %v1963
    %v1966 = vtanh.pop %v1964
    %v1967 = vadd.f32 %v1965, 1.0
    %v1968 = vadd.f32 %v1966, 1.0
    %v1969 = vmul.f32 %v1967, 0.5
    %v1970 = vmul.f32 %v1968, 0.5
    %v1971 = vmul.f32 %v1947, %v1969
    %v1972 = vmul.f32 %v1952, %v1970
    %v1973 = vlaneseq
    %v1974 = vshrl.u32 %v1973, 7
    %v1975 = vsub.s32 5, %v1974
    %v1976 = vrot.slane %v1170, %v1975
    %1977 = vmatprep.subr.mxu0 0.0
    %1978 = vmatpush1.msra.mxu0 %v1154
    %1979 = vmatprep.subr.mxu0 0.0
    %1980 = vmatpush1.msra.mxu0 %v1155
    %1981 = vmatprep.subr.mxu0 0.0
    %1982 = vmatpush1.msra.mxu0 %v1156
    %1983 = vmatprep.subr.mxu0 0.0
    %1984 = vmatpush1.msra.mxu0 %v1157
    %1985 = vmatprep.subr.mxu0 0.0
    %1986 = vmatpush1.msra.mxu0 %v1158
    %1987 = vmatprep.subr.mxu0 0.0
    %1988 = vmatpush1.msra.mxu0 %v1159
    %1989 = vmatprep.subr.mxu0 0.0
    %1990 = vmatpush1.msra.mxu0 %v1160
    %1991 = vmatprep.subr.mxu0 0.0
    %1992 = vmatpush1.msra.mxu0 %v1161
    %1993 = vmatprep.subr.mxu0 0.0
    %1994 = vmatpush1.msra.mxu0 %v1162
    %1995 = vmatprep.subr.mxu0 0.0
    %1996 = vmatpush1.msra.mxu0 %v1163
    %1997 = vmatprep.subr.mxu0 0.0
    %1998 = vmatpush1.msra.mxu0 %v1164
    %1999 = vmatprep.subr.mxu0 0.0
    %2000 = vmatpush1.msra.mxu0 %v1165
    %2001 = vmatprep.subr.mxu0 0.0
    %2002 = vmatpush1.msra.mxu0 %v1166
    %2003 = vmatprep.subr.mxu0 0.0
    %2004 = vmatpush1.msra.mxu0 %v1167
    %2005 = vmatprep.subr.mxu0 0.0
    %2006 = vmatpush1.msra.mxu0 %v1168
    %2007 = vmatprep.subr.mxu0 0.0
    %2008 = vmatpush1.msra.mxu0 %v1169
    %2009 = vmatprep.subr.mxu0 0.0
    %2010 = vmatpush1.msra.mxu0 0.0
    %2011 = vmatprep.subr.mxu0 0.0
    %2012 = vmatpush1.msra.mxu0 0.0
    %2013 = vmatprep.subr.mxu0 0.0
    %2014 = vmatpush1.msra.mxu0 0.0
    %2015 = vmatprep.subr.mxu0 0.0
    %2016 = vmatpush1.msra.mxu0 0.0
    %2017 = vmatprep.subr.mxu0 0.0
    %2018 = vmatpush1.msra.mxu0 0.0
    %2019 = vmatprep.subr.mxu0 0.0
    %2020 = vmatpush1.msra.mxu0 0.0
    %2021 = vmatprep.subr.mxu0 0.0
    %2022 = vmatpush1.msra.mxu0 0.0
    %2023 = vmatprep.subr.mxu0 0.0
    %2024 = vmatpush1.msra.mxu0 0.0
    %2025 = vmatprep.subr.mxu0 0.0
    %2026 = vmatpush1.msra.mxu0 0.0
    %2027 = vmatprep.subr.mxu0 0.0
    %2028 = vmatpush1.msra.mxu0 0.0
    %2029 = vmatprep.subr.mxu0 0.0
    %2030 = vmatpush1.msra.mxu0 0.0
    %2031 = vmatprep.subr.mxu0 0.0
    %2032 = vmatpush1.msra.mxu0 0.0
    %2033 = vmatprep.subr.mxu0 0.0
    %2034 = vmatpush1.msra.mxu0 0.0
    %2035 = vmatprep.subr.mxu0 0.0
    %2036 = vmatpush1.msra.mxu0 0.0
    %2037 = vmatprep.subr.mxu0 0.0
    %2038 = vmatpush1.msra.mxu0 0.0
    %2039 = vmatprep.subr.mxu0 0.0
    %2040 = vmatpush1.msra.mxu0 0.0
    %2041 = vmatprep.mubr.f32.mxu0 0.0
    %2042 = vmatmul.mubr.f32.gmra.mrb[0].mxu0 %v1971
    %v2043 = vpop.f32.mrb[0].mxu0
    %v2044 = vadd.f32 %v1976, %v2043
    %v2045 = vpop.f32.mrb[0].mxu0
    %2046 = vmatprep.mubr.f32.mxu0 0.0
    %2047 = vmatmul.mubr.f32.gmra.mrb[0].mxu0 %v1972
    %v2048 = vpop.f32.mrb[0].mxu0
    %v2049 = vadd.f32 %v1976, %v2048
    %v2050 = vpop.f32.mrb[0].mxu0
    %2051 = vdwg.mxu0
    %v2052 = vadd.f32 %v1868, %v2044
    %v2053 = vadd.f32 %v1869, %v2049
    %v2054 = vsel %vm138, %v2052, 0.0
    %2055 = vadd.xlane.f32.xlu0 %v2054
    %v2056 = vpop.xlane.xlu0 %2055
    %v2057 = vsel %vm138, %v2053, 0.0
    %2058 = vadd.xlane.f32.xlu0 %v2057
    %v2059 = vpop.xlane.xlu0 %2058
    %v2060 = vmul.f32 %v2056, %v145
    %v2061 = vmul.f32 %v2059, %v145
    %v2062 = vsub.f32 %v2052, %v2060
    %v2063 = vsub.f32 %v2053, %v2061
    %v2064 = vmul.f32 %v2062, %v2062
    %v2065 = vmul.f32 %v2063, %v2063
    %v2066 = vsel %vm138, %v2064, 0.0
    %2067 = vadd.xlane.f32.xlu0 %v2066
    %v2068 = vpop.xlane.xlu0 %2067
    %v2069 = vsel %vm138, %v2065, 0.0
    %2070 = vadd.xlane.f32.xlu0 %v2069
    %v2071 = vpop.xlane.xlu0 %2070
    %v2072 = vmul.f32 %v2068, %v145
    %v2073 = vmul.f32 %v2071, %v145
    %v2074 = vadd.f32 %v2072, 1e-12
    %v2075 = vadd.f32 %v2073, 1e-12
    %v2076 = vrsqrt.pop %v2074
    %v2077 = vrsqrt.pop %v2075
    %v2078 = vmul.f32 %v2062, %v2076
    %v2079 = vmul.f32 %v2063, %v2077
    %v2080 = vlaneseq
    %v2081 = vshrl.u32 %v2080, 7
    %v2082 = vsub.s32 6, %v2081
    %v2083 = vrot.slane %v1170, %v2082
    %v2084 = vmul.f32 %v2078, %v2083
    %v2085 = vmul.f32 %v2079, %v2083
    %v2086 = vlaneseq
    %v2087 = vshrl.u32 %v2086, 7
    %v2088 = vsub.s32 7, %v2087
    %v2089 = vrot.slane %v1170, %v2088
    %v2090 = vadd.f32 %v2084, %v2089
    %v2091 = vadd.f32 %v2085, %v2089
    %v2092 = vld [vmem:[#allocation2 + $0x238] sm:$0xff]
    %v2093 = vld [vmem:[#allocation2 + $0x240] sm:$0xff]
    %v2094 = vld [vmem:[#allocation2 + $0x248] sm:$0xff]
    %v2095 = vld [vmem:[#allocation2 + $0x250] sm:$0xff]
    %v2096 = vld [vmem:[#allocation2 + $0x258] sm:$0xff]
    %v2097 = vld [vmem:[#allocation2 + $0x260] sm:$0xff]
    %v2098 = vld [vmem:[#allocation2 + $0x268] sm:$0xff]
    %v2099 = vld [vmem:[#allocation2 + $0x270] sm:$0xff]
    %v2100 = vld [vmem:[#allocation2 + $0x278] sm:$0xff]
    %v2101 = vld [vmem:[#allocation2 + $0x280] sm:$0xff]
    %v2102 = vld [vmem:[#allocation2 + $0x288] sm:$0xff]
    %v2103 = vld [vmem:[#allocation2 + $0x290] sm:$0xff]
    %v2104 = vld [vmem:[#allocation2 + $0x298] sm:$0x7]
    %v2105 = vlaneseq
    %v2106 = vshrl.u32 %v2105, 7
    %v2107 = vsub.s32 0, %v2106
    %v2108 = vrot.slane %v2104, %v2107
    %v2110 = vsel %vm138, %v2090, 0
    %v2113 = vsel %vm138, %v2091, 0
    %2115 = vmatprep.subr.mxu0 0.0
    %2116 = vmatpush1.msra.mxu0 %v2092
    %2117 = vmatprep.subr.mxu0 0.0
    %2118 = vmatpush1.msra.mxu0 %v2093
    %2119 = vmatprep.subr.mxu0 0.0
    %2120 = vmatpush1.msra.mxu0 %v2094
    %2121 = vmatprep.subr.mxu0 0.0
    %2122 = vmatpush1.msra.mxu0 %v2095
    %2123 = vmatprep.subr.mxu0 0.0
    %2124 = vmatpush1.msra.mxu0 0.0
    %2125 = vmatprep.subr.mxu0 0.0
    %2126 = vmatpush1.msra.mxu0 0.0
    %2127 = vmatprep.subr.mxu0 0.0
    %2128 = vmatpush1.msra.mxu0 0.0
    %2129 = vmatprep.subr.mxu0 0.0
    %2130 = vmatpush1.msra.mxu0 0.0
    %2131 = vmatprep.subr.mxu0 0.0
    %2132 = vmatpush1.msra.mxu0 0.0
    %2133 = vmatprep.subr.mxu0 0.0
    %2134 = vmatpush1.msra.mxu0 0.0
    %2135 = vmatprep.subr.mxu0 0.0
    %2136 = vmatpush1.msra.mxu0 0.0
    %2137 = vmatprep.subr.mxu0 0.0
    %2138 = vmatpush1.msra.mxu0 0.0
    %2139 = vmatprep.subr.mxu0 0.0
    %2140 = vmatpush1.msra.mxu0 0.0
    %2141 = vmatprep.subr.mxu0 0.0
    %2142 = vmatpush1.msra.mxu0 0.0
    %2143 = vmatprep.subr.mxu0 0.0
    %2144 = vmatpush1.msra.mxu0 0.0
    %2145 = vmatprep.subr.mxu0 0.0
    %2146 = vmatpush1.msra.mxu0 0.0
    %2147 = vmatprep.subr.mxu0 0.0
    %2148 = vmatpush1.msra.mxu0 0.0
    %2149 = vmatprep.subr.mxu0 0.0
    %2150 = vmatpush1.msra.mxu0 0.0
    %2151 = vmatprep.subr.mxu0 0.0
    %2152 = vmatpush1.msra.mxu0 0.0
    %2153 = vmatprep.subr.mxu0 0.0
    %2154 = vmatpush1.msra.mxu0 0.0
    %2155 = vmatprep.subr.mxu0 0.0
    %2156 = vmatpush1.msra.mxu0 0.0
    %2157 = vmatprep.subr.mxu0 0.0
    %2158 = vmatpush1.msra.mxu0 0.0
    %2159 = vmatprep.subr.mxu0 0.0
    %2160 = vmatpush1.msra.mxu0 0.0
    %2161 = vmatprep.subr.mxu0 0.0
    %2162 = vmatpush1.msra.mxu0 0.0
    %2163 = vmatprep.subr.mxu0 0.0
    %2164 = vmatpush1.msra.mxu0 0.0
    %2165 = vmatprep.subr.mxu0 0.0
    %2166 = vmatpush1.msra.mxu0 0.0
    %2167 = vmatprep.subr.mxu0 0.0
    %2168 = vmatpush1.msra.mxu0 0.0
    %2169 = vmatprep.subr.mxu0 0.0
    %2170 = vmatpush1.msra.mxu0 0.0
    %2171 = vmatprep.subr.mxu0 0.0
    %2172 = vmatpush1.msra.mxu0 0.0
    %2173 = vmatprep.subr.mxu0 0.0
    %2174 = vmatpush1.msra.mxu0 0.0
    %2175 = vmatprep.subr.mxu0 0.0
    %2176 = vmatpush1.msra.mxu0 0.0
    %2177 = vmatprep.subr.mxu0 0.0
    %2178 = vmatpush1.msra.mxu0 0.0
    %2179 = vmatprep.mubr.f32.mxu0 0.0
    %2180 = vmatmul.mubr.f32.gmra.mrb[0].mxu0 %v2110
    %v2181 = vpop.f32.mrb[0].mxu0
    %v2182 = vadd.f32 %v2108, %v2181
    %v2183 = vpop.f32.mrb[0].mxu0
    %2184 = vmatprep.mubr.f32.mxu0 0.0
    %2185 = vmatmul.mubr.f32.gmra.mrb[0].mxu0 %v2113
    %v2186 = vpop.f32.mrb[0].mxu0
    %v2187 = vadd.f32 %v2108, %v2186
    %v2188 = vpop.f32.mrb[0].mxu0
    %2189 = vdwg.mxu0
    %v2190 = vmax.f32 %v2182, 0.0
    %v2191 = vmax.f32 %v2187, 0.0
    %v2192 = vlaneseq
    %v2193 = vshrl.u32 %v2192, 7
    %v2194 = vsub.s32 1, %v2193
    %v2195 = vrot.slane %v2104, %v2194
    %v2197 = vsel %vm138, %v2190, 0
    %v2200 = vsel %vm138, %v2191, 0
    %2202 = vmatprep.subr.mxu0 0.0
    %2203 = vmatpush1.msra.mxu0 %v2096
    %2204 = vmatprep.subr.mxu0 0.0
    %2205 = vmatpush1.msra.mxu0 %v2097
    %2206 = vmatprep.subr.mxu0 0.0
    %2207 = vmatpush1.msra.mxu0 %v2098
    %2208 = vmatprep.subr.mxu0 0.0
    %2209 = vmatpush1.msra.mxu0 %v2099
    %2210 = vmatprep.subr.mxu0 0.0
    %2211 = vmatpush1.msra.mxu0 0.0
    %2212 = vmatprep.subr.mxu0 0.0
    %2213 = vmatpush1.msra.mxu0 0.0
    %2214 = vmatprep.subr.mxu0 0.0
    %2215 = vmatpush1.msra.mxu0 0.0
    %2216 = vmatprep.subr.mxu0 0.0
    %2217 = vmatpush1.msra.mxu0 0.0
    %2218 = vmatprep.subr.mxu0 0.0
    %2219 = vmatpush1.msra.mxu0 0.0
    %2220 = vmatprep.subr.mxu0 0.0
    %2221 = vmatpush1.msra.mxu0 0.0
    %2222 = vmatprep.subr.mxu0 0.0
    %2223 = vmatpush1.msra.mxu0 0.0
    %2224 = vmatprep.subr.mxu0 0.0
    %2225 = vmatpush1.msra.mxu0 0.0
    %2226 = vmatprep.subr.mxu0 0.0
    %2227 = vmatpush1.msra.mxu0 0.0
    %2228 = vmatprep.subr.mxu0 0.0
    %2229 = vmatpush1.msra.mxu0 0.0
    %2230 = vmatprep.subr.mxu0 0.0
    %2231 = vmatpush1.msra.mxu0 0.0
    %2232 = vmatprep.subr.mxu0 0.0
    %2233 = vmatpush1.msra.mxu0 0.0
    %2234 = vmatprep.subr.mxu0 0.0
    %2235 = vmatpush1.msra.mxu0 0.0
    %2236 = vmatprep.subr.mxu0 0.0
    %2237 = vmatpush1.msra.mxu0 0.0
    %2238 = vmatprep.subr.mxu0 0.0
    %2239 = vmatpush1.msra.mxu0 0.0
    %2240 = vmatprep.subr.mxu0 0.0
    %2241 = vmatpush1.msra.mxu0 0.0
    %2242 = vmatprep.subr.mxu0 0.0
    %2243 = vmatpush1.msra.mxu0 0.0
    %2244 = vmatprep.subr.mxu0 0.0
    %2245 = vmatpush1.msra.mxu0 0.0
    %2246 = vmatprep.subr.mxu0 0.0
    %2247 = vmatpush1.msra.mxu0 0.0
    %2248 = vmatprep.subr.mxu0 0.0
    %2249 = vmatpush1.msra.mxu0 0.0
    %2250 = vmatprep.subr.mxu0 0.0
    %2251 = vmatpush1.msra.mxu0 0.0
    %2252 = vmatprep.subr.mxu0 0.0
    %2253 = vmatpush1.msra.mxu0 0.0
    %2254 = vmatprep.subr.mxu0 0.0
    %2255 = vmatpush1.msra.mxu0 0.0
    %2256 = vmatprep.subr.mxu0 0.0
    %2257 = vmatpush1.msra.mxu0 0.0
    %2258 = vmatprep.subr.mxu0 0.0
    %2259 = vmatpush1.msra.mxu0 0.0
    %2260 = vmatprep.subr.mxu0 0.0
    %2261 = vmatpush1.msra.mxu0 0.0
    %2262 = vmatprep.subr.mxu0 0.0
    %2263 = vmatpush1.msra.mxu0 0.0
    %2264 = vmatprep.subr.mxu0 0.0
    %2265 = vmatpush1.msra.mxu0 0.0
    %2266 = vmatprep.mubr.f32.mxu0 0.0
    %2267 = vmatmul.mubr.f32.gmra.mrb[0].mxu0 %v2197
    %v2268 = vpop.f32.mrb[0].mxu0
    %v2269 = vadd.f32 %v2195, %v2268
    %v2270 = vpop.f32.mrb[0].mxu0
    %2271 = vmatprep.mubr.f32.mxu0 0.0
    %2272 = vmatmul.mubr.f32.gmra.mrb[0].mxu0 %v2200
    %v2273 = vpop.f32.mrb[0].mxu0
    %v2274 = vadd.f32 %v2195, %v2273
    %v2275 = vpop.f32.mrb[0].mxu0
    %2276 = vdwg.mxu0
    %v2277 = vmax.f32 %v2269, 0.0
    %v2278 = vmax.f32 %v2274, 0.0
    %v2280 = vsel %vm138, %v2277, 0
    %v2283 = vsel %vm138, %v2278, 0
    %2285 = vmatprep.subr.mxu0 0.0
    %2286 = vmatpush1.msra.mxu0 %v2096
    %2287 = vmatprep.subr.mxu0 0.0
    %2288 = vmatpush1.msra.mxu0 %v2097
    %2289 = vmatprep.subr.mxu0 0.0
    %2290 = vmatpush1.msra.mxu0 %v2098
    %2291 = vmatprep.subr.mxu0 0.0
    %2292 = vmatpush1.msra.mxu0 %v2099
    %2293 = vmatprep.subr.mxu0 0.0
    %2294 = vmatpush1.msra.mxu0 0.0
    %2295 = vmatprep.subr.mxu0 0.0
    %2296 = vmatpush1.msra.mxu0 0.0
    %2297 = vmatprep.subr.mxu0 0.0
    %2298 = vmatpush1.msra.mxu0 0.0
    %2299 = vmatprep.subr.mxu0 0.0
    %2300 = vmatpush1.msra.mxu0 0.0
    %2301 = vmatprep.subr.mxu0 0.0
    %2302 = vmatpush1.msra.mxu0 0.0
    %2303 = vmatprep.subr.mxu0 0.0
    %2304 = vmatpush1.msra.mxu0 0.0
    %2305 = vmatprep.subr.mxu0 0.0
    %2306 = vmatpush1.msra.mxu0 0.0
    %2307 = vmatprep.subr.mxu0 0.0
    %2308 = vmatpush1.msra.mxu0 0.0
    %2309 = vmatprep.subr.mxu0 0.0
    %2310 = vmatpush1.msra.mxu0 0.0
    %2311 = vmatprep.subr.mxu0 0.0
    %2312 = vmatpush1.msra.mxu0 0.0
    %2313 = vmatprep.subr.mxu0 0.0
    %2314 = vmatpush1.msra.mxu0 0.0
    %2315 = vmatprep.subr.mxu0 0.0
    %2316 = vmatpush1.msra.mxu0 0.0
    %2317 = vmatprep.subr.mxu0 0.0
    %2318 = vmatpush1.msra.mxu0 0.0
    %2319 = vmatprep.subr.mxu0 0.0
    %2320 = vmatpush1.msra.mxu0 0.0
    %2321 = vmatprep.subr.mxu0 0.0
    %2322 = vmatpush1.msra.mxu0 0.0
    %2323 = vmatprep.subr.mxu0 0.0
    %2324 = vmatpush1.msra.mxu0 0.0
    %2325 = vmatprep.subr.mxu0 0.0
    %2326 = vmatpush1.msra.mxu0 0.0
    %2327 = vmatprep.subr.mxu0 0.0
    %2328 = vmatpush1.msra.mxu0 0.0
    %2329 = vmatprep.subr.mxu0 0.0
    %2330 = vmatpush1.msra.mxu0 0.0
    %2331 = vmatprep.subr.mxu0 0.0
    %2332 = vmatpush1.msra.mxu0 0.0
    %2333 = vmatprep.subr.mxu0 0.0
    %2334 = vmatpush1.msra.mxu0 0.0
    %2335 = vmatprep.subr.mxu0 0.0
    %2336 = vmatpush1.msra.mxu0 0.0
    %2337 = vmatprep.subr.mxu0 0.0
    %2338 = vmatpush1.msra.mxu0 0.0
    %2339 = vmatprep.subr.mxu0 0.0
    %2340 = vmatpush1.msra.mxu0 0.0
    %2341 = vmatprep.subr.mxu0 0.0
    %2342 = vmatpush1.msra.mxu0 0.0
    %2343 = vmatprep.subr.mxu0 0.0
    %2344 = vmatpush1.msra.mxu0 0.0
    %2345 = vmatprep.subr.mxu0 0.0
    %2346 = vmatpush1.msra.mxu0 0.0
    %2347 = vmatprep.subr.mxu0 0.0
    %2348 = vmatpush1.msra.mxu0 0.0
    %2349 = vmatprep.mubr.f32.mxu0 0.0
    %2350 = vmatmul.mubr.f32.gmra.mrb[0].mxu0 %v2280
    %v2351 = vpop.f32.mrb[0].mxu0
    %v2352 = vadd.f32 %v2195, %v2351
    %v2353 = vpop.f32.mrb[0].mxu0
    %2354 = vmatprep.mubr.f32.mxu0 0.0
    %2355 = vmatmul.mubr.f32.gmra.mrb[0].mxu0 %v2283
    %v2356 = vpop.f32.mrb[0].mxu0
    %v2357 = vadd.f32 %v2195, %v2356
    %v2358 = vpop.f32.mrb[0].mxu0
    %2359 = vdwg.mxu0
    %v2360 = vlaneseq
    %v2361 = vshrl.u32 %v2360, 7
    %v2362 = vsub.s32 2, %v2361
    %v2363 = vrot.slane %v2104, %v2362
    %v2365 = vsel %vm138, %v2352, 0
    %v2368 = vsel %vm138, %v2357, 0
    %2370 = vmatprep.subr.mxu0 0.0
    %2371 = vmatpush1.msra.mxu0 %v2100
    %2372 = vmatprep.subr.mxu0 0.0
    %2373 = vmatpush1.msra.mxu0 %v2101
    %2374 = vmatprep.subr.mxu0 0.0
    %2375 = vmatpush1.msra.mxu0 %v2102
    %2376 = vmatprep.subr.mxu0 0.0
    %2377 = vmatpush1.msra.mxu0 %v2103
    %2378 = vmatprep.subr.mxu0 0.0
    %2379 = vmatpush1.msra.mxu0 0.0
    %2380 = vmatprep.subr.mxu0 0.0
    %2381 = vmatpush1.msra.mxu0 0.0
    %2382 = vmatprep.subr.mxu0 0.0
    %2383 = vmatpush1.msra.mxu0 0.0
    %2384 = vmatprep.subr.mxu0 0.0
    %2385 = vmatpush1.msra.mxu0 0.0
    %2386 = vmatprep.subr.mxu0 0.0
    %2387 = vmatpush1.msra.mxu0 0.0
    %2388 = vmatprep.subr.mxu0 0.0
    %2389 = vmatpush1.msra.mxu0 0.0
    %2390 = vmatprep.subr.mxu0 0.0
    %2391 = vmatpush1.msra.mxu0 0.0
    %2392 = vmatprep.subr.mxu0 0.0
    %2393 = vmatpush1.msra.mxu0 0.0
    %2394 = vmatprep.subr.mxu0 0.0
    %2395 = vmatpush1.msra.mxu0 0.0
    %2396 = vmatprep.subr.mxu0 0.0
    %2397 = vmatpush1.msra.mxu0 0.0
    %2398 = vmatprep.subr.mxu0 0.0
    %2399 = vmatpush1.msra.mxu0 0.0
    %2400 = vmatprep.subr.mxu0 0.0
    %2401 = vmatpush1.msra.mxu0 0.0
    %2402 = vmatprep.subr.mxu0 0.0
    %2403 = vmatpush1.msra.mxu0 0.0
    %2404 = vmatprep.subr.mxu0 0.0
    %2405 = vmatpush1.msra.mxu0 0.0
    %2406 = vmatprep.subr.mxu0 0.0
    %2407 = vmatpush1.msra.mxu0 0.0
    %2408 = vmatprep.subr.mxu0 0.0
    %2409 = vmatpush1.msra.mxu0 0.0
    %2410 = vmatprep.subr.mxu0 0.0
    %2411 = vmatpush1.msra.mxu0 0.0
    %2412 = vmatprep.subr.mxu0 0.0
    %2413 = vmatpush1.msra.mxu0 0.0
    %2414 = vmatprep.subr.mxu0 0.0
    %2415 = vmatpush1.msra.mxu0 0.0
    %2416 = vmatprep.subr.mxu0 0.0
    %2417 = vmatpush1.msra.mxu0 0.0
    %2418 = vmatprep.subr.mxu0 0.0
    %2419 = vmatpush1.msra.mxu0 0.0
    %2420 = vmatprep.subr.mxu0 0.0
    %2421 = vmatpush1.msra.mxu0 0.0
    %2422 = vmatprep.subr.mxu0 0.0
    %2423 = vmatpush1.msra.mxu0 0.0
    %2424 = vmatprep.subr.mxu0 0.0
    %2425 = vmatpush1.msra.mxu0 0.0
    %2426 = vmatprep.subr.mxu0 0.0
    %2427 = vmatpush1.msra.mxu0 0.0
    %2428 = vmatprep.subr.mxu0 0.0
    %2429 = vmatpush1.msra.mxu0 0.0
    %2430 = vmatprep.subr.mxu0 0.0
    %2431 = vmatpush1.msra.mxu0 0.0
    %2432 = vmatprep.subr.mxu0 0.0
    %2433 = vmatpush1.msra.mxu0 0.0
    %2434 = vmatprep.mubr.f32.mxu0 0.0
    %2435 = vmatmul.mubr.f32.gmra.mrb[0].mxu0 %v2365
    %v2436 = vpop.f32.mrb[0].mxu0
    %v2437 = vadd.f32 %v2363, %v2436
    %v2438 = vpop.f32.mrb[0].mxu0
    %2439 = vmatprep.mubr.f32.mxu0 0.0
    %2440 = vmatmul.mubr.f32.gmra.mrb[0].mxu0 %v2368
    %v2441 = vpop.f32.mrb[0].mxu0
    %v2442 = vadd.f32 %v2363, %v2441
    %v2443 = vpop.f32.mrb[0].mxu0
    %2444 = vdwg.mxu0
    %2445 = vst [vmem:[#allocation5] sm:$0x1] %v2437
    %2446 = vst [vmem:[#allocation5 + $0x1] sm:$0x1] %v2442
    // Predicated region
    $region18: #{forward.1} parent=1 // pred_check
      _
    $region19: #{forward.1} parent=1 // pred_check_branch
      %2448 = sbr.rel (0) target = $region21
    $region20: #{forward.1} parent=1 // pred_region
      %s2450 = ssub.s32 32, 32
      %2451 = vsyncadd [#allocation4], %s2450
      %s2453 = sshll.u32 [#allocation5], 4
      %s2454 = int_to_ptr.vmem [resolvable:$true] %s2453
      %2456 = dma.vmem_to_hbm [thread:$0]  %s2454, 32, %s3, [#allocation4]
    $region21: #{forward.1} parent=1 // pred_fallthru
      _
    // Predicated region
    $region22: #{forward.1} parent=1 // pred_check
      _
    $region23: #{forward.1} parent=1 // pred_check_branch
      %2458 = sbr.rel (0) target = $region25
    $region24: #{forward.1} parent=1 // pred_region
      %2459 = dma.done [#allocation4], 32
    $region25: #{forward.1} parent=1 // pred_fallthru
      _
    %2460 = vsyncpa [#allocation3], 1
    %2461 = vsyncpa [#allocation4], 1

</llo_original>
